<compile_context>
chip_gen: v5e
topology: v5e:2x2
jax: 0.10.0
libtpu: 0.0.40
codegen_flags: <defaults>
</compile_context>

<pallas_src>
import functools
import math

import jax
import jax.numpy as jnp
from jax.experimental import pallas as pl
from jax.experimental.pallas import tpu as pltpu


# ----------------------------------------------------------------------------
# Pallas kernels
# ----------------------------------------------------------------------------

def _layernorm(z, gamma, beta, eps):
    mu = jnp.mean(z, axis=-1, keepdims=True)
    var = jnp.mean((z - mu) * (z - mu), axis=-1, keepdims=True)
    return (z - mu) * jax.lax.rsqrt(var + eps) * gamma + beta


def transformer_block_kernel(
    x_ref,
    ln1_g_ref, ln1_b_ref,
    wq_ref, bq_ref, wk_ref, bk_ref, wv_ref, bv_ref, wo_ref, bo_ref,
    ln2_g_ref, ln2_b_ref,
    w1_ref, b1_ref, w2_ref, b2_ref,
    fin_g_ref, fin_b_ref,
    o_ref,
    *, n_heads, head_dim, apply_final_norm,
):
    # One grid step == one batch element; block shapes cover the full (S, D)
    # slab, so everything below is VMEM-resident MXU/VPU compute.
    x = x_ref[0].astype(jnp.float32)                      # (S, D) f32 residual stream

    # ---- attention branch --------------------------------------------------
    xa = _layernorm(x, ln1_g_ref[0], ln1_b_ref[0], 1e-6)
    xa_bf = xa.astype(jnp.bfloat16)                        # bf16 into the MXU

    q = jnp.dot(xa_bf, wq_ref[...], preferred_element_type=jnp.float32) + bq_ref[0]
    k = jnp.dot(xa_bf, wk_ref[...], preferred_element_type=jnp.float32) + bk_ref[0]
    v = jnp.dot(xa_bf, wv_ref[...], preferred_element_type=jnp.float32) + bv_ref[0]

    # Split heads onto a leading batch axis (static lane slices, one stack);
    # attention matmuls + softmax are then batched over all heads at once.
    def split_heads(t):
        t = t.astype(jnp.bfloat16)
        return jnp.stack(
            [t[:, h * head_dim:(h + 1) * head_dim] for h in range(n_heads)],
            axis=0,
        )                                                  # (H, S, hd)

    qh, kh, vh = split_heads(q), split_heads(k), split_heads(v)

    scale = 1.0 / math.sqrt(head_dim)
    scores = jnp.einsum('hqd,hkd->hqk', qh, kh,
                        preferred_element_type=jnp.float32) * scale     # (H, S, S) f32
    scores = scores - jnp.max(scores, axis=-1, keepdims=True)
    p = jnp.exp(scores)
    p = p * pl.reciprocal(jnp.sum(p, axis=-1, keepdims=True), approx=True)
    ctx = jnp.einsum('hqk,hkd->hqd', p.astype(jnp.bfloat16), vh,
                     preferred_element_type=jnp.float32)                # (H, S, hd) f32

    attn = jnp.concatenate([ctx[h] for h in range(n_heads)], axis=-1)   # (S, D)
    attn = jnp.dot(attn.astype(jnp.bfloat16), wo_ref[...],
                   preferred_element_type=jnp.float32) + bo_ref[0]
    x = x + attn                                           # residual (f32)

    # ---- MLP branch ----------------------------------------------------------
    xm = _layernorm(x, ln2_g_ref[0], ln2_b_ref[0], 1e-6)
    h1 = jnp.dot(xm.astype(jnp.bfloat16), w1_ref[...],
                 preferred_element_type=jnp.float32) + b1_ref[0]
    # exact GELU (erf form), matches torch.nn.GELU() default
    h1 = 0.5 * h1 * (1.0 + jax.lax.erf(h1 * (1.0 / math.sqrt(2.0))))
    h2 = jnp.dot(h1.astype(jnp.bfloat16), w2_ref[...],
                 preferred_element_type=jnp.float32) + b2_ref[0]
    x = x + h2                                             # residual (f32)

    # Fused Encoder.norm (nn.LayerNorm default eps = 1e-5) on the last layer.
    if apply_final_norm:
        x = _layernorm(x, fin_g_ref[0], fin_b_ref[0], 1e-5)

    o_ref[0] = x.astype(o_ref.dtype)


# ----------------------------------------------------------------------------
# Wrappers
# ----------------------------------------------------------------------------

def _full_spec(shape):
    # whole-array block, constant index_map (broadcast over the batch grid)
    return pl.BlockSpec(shape, lambda b: tuple(0 for _ in shape))


def run_transformer_block(x, p, n_heads, final_gamma, final_beta, apply_final_norm):
    B, S, D = x.shape
    M = p["w1"].shape[1]
    head_dim = D // n_heads

    kernel = functools.partial(
        transformer_block_kernel,
        n_heads=n_heads, head_dim=head_dim, apply_final_norm=apply_final_norm,
    )

    in_specs = [
        pl.BlockSpec((1, S, D), lambda b: (b, 0, 0)),       # x
        _full_spec((1, D)), _full_spec((1, D)),             # ln1 gamma/beta
        _full_spec((D, D)), _full_spec((1, D)),             # Wq, bq
        _full_spec((D, D)), _full_spec((1, D)),             # Wk, bk
        _full_spec((D, D)), _full_spec((1, D)),             # Wv, bv
        _full_spec((D, D)), _full_spec((1, D)),             # Wo, bo
        _full_spec((1, D)), _full_spec((1, D)),             # ln2 gamma/beta
        _full_spec((D, M)), _full_spec((1, M)),             # W1, b1
        _full_spec((M, D)), _full_spec((1, D)),             # W2, b2
        _full_spec((1, D)), _full_spec((1, D)),             # final LN gamma/beta
    ]

    # Explicit VMEM budget from the actual resident footprint:
    #   bf16 matmul weights + f32 biases/LN params + double-buffered (S, D)
    #   activation slabs + in-kernel intermediates (q/k/v, scores, MLP hidden).
    w_bytes = 2 * (4 * D * D + 2 * D * M)                   # bf16 weights
    p_bytes = 4 * (10 * D + M)                              # f32 biases + LN params
    act_bytes = 4 * S * D                                   # one (S, D) f32 slab
    inter_bytes = 4 * (6 * S * D + n_heads * S * S + 2 * S * M)
    est = 2 * (w_bytes + p_bytes + 2 * act_bytes) + inter_bytes
    vmem_limit = int(min(127 * 1024 * 1024, max(32 * 1024 * 1024, int(1.5 * est))))

    return pl.pallas_call(
        kernel,
        out_shape=jax.ShapeDtypeStruct((B, S, D), x.dtype),
        grid_spec=pltpu.PrefetchScalarGridSpec(
            num_scalar_prefetch=0,
            grid=(B,),
            in_specs=in_specs,
            out_specs=pl.BlockSpec((1, S, D), lambda b: (b, 0, 0)),
        ),
        compiler_params=pltpu.CompilerParams(
            dimension_semantics=("parallel",),
            vmem_limit_bytes=vmem_limit,
        ),
    )(
        x,
        p["ln1_g"], p["ln1_b"],
        p["wq"], p["bq"], p["wk"], p["bk"], p["wv"], p["bv"], p["wo"], p["bo"],
        p["ln2_g"], p["ln2_b"],
        p["w1"], p["b1"], p["w2"], p["b2"],
        final_gamma, final_beta,
    )


def encoder_forward(x, layer_params, final_gamma, final_beta, n_heads):
    assert layer_params, "Encoder must have at least one transformer block"
    n_layers = len(layer_params)
    for i, p in enumerate(layer_params):
        x = run_transformer_block(
            x, p, n_heads, final_gamma, final_beta,
            apply_final_norm=(i == n_layers - 1),
        )
    return x


# ----------------------------------------------------------------------------
# Deterministic parameter construction
# ----------------------------------------------------------------------------

def init_encoder_params(key, n_layers, hidden_dim, mlp_dim):
    wdt = jnp.bfloat16     # matmul weights stored in bf16 (MXU-native)
    layer_params = []
    for _ in range(n_layers):
        key, *ks = jax.random.split(key, 9)
        p = {
            "ln1_g": jnp.ones((1, hidden_dim), jnp.float32),
            "ln1_b": jnp.zeros((1, hidden_dim), jnp.float32),
            "wq": (0.05 * jax.random.normal(ks[0], (hidden_dim, hidden_dim), jnp.float32)).astype(wdt),
            "bq": 0.01 * jax.random.normal(ks[1], (1, hidden_dim), jnp.float32),
            "wk": (0.05 * jax.random.normal(ks[2], (hidden_dim, hidden_dim), jnp.float32)).astype(wdt),
            "bk": 0.01 * jax.random.normal(ks[3], (1, hidden_dim), jnp.float32),
            "wv": (0.05 * jax.random.normal(ks[4], (hidden_dim, hidden_dim), jnp.float32)).astype(wdt),
            "bv": 0.01 * jax.random.normal(ks[5], (1, hidden_dim), jnp.float32),
            "wo": (0.05 * jax.random.normal(ks[6], (hidden_dim, hidden_dim), jnp.float32)).astype(wdt),
            "bo": 0.01 * jax.random.normal(ks[7], (1, hidden_dim), jnp.float32),
            "ln2_g": jnp.ones((1, hidden_dim), jnp.float32),
            "ln2_b": jnp.zeros((1, hidden_dim), jnp.float32),
        }
        key, k1, k2, k3, k4 = jax.random.split(key, 5)
        p["w1"] = (0.05 * jax.random.normal(k1, (hidden_dim, mlp_dim), jnp.float32)).astype(wdt)
        p["b1"] = 1e-6 * jax.random.normal(k2, (1, mlp_dim), jnp.float32)
        p["w2"] = (0.05 * jax.random.normal(k3, (mlp_dim, hidden_dim), jnp.float32)).astype(wdt)
        p["b2"] = 1e-6 * jax.random.normal(k4, (1, hidden_dim), jnp.float32)
        layer_params.append(p)
    final_gamma = jnp.ones((1, hidden_dim), jnp.float32)
    final_beta = jnp.zeros((1, hidden_dim), jnp.float32)
    return layer_params, final_gamma, final_beta


if __name__ == "__main__":
    # Small ViT-encoder-like config
    B, S = 2, 8            # batch, sequence length (tokens)
    hidden_dim = 32
    mlp_dim = 64
    n_heads = 4
    n_layers = 2
    # dropout_rate -> 0 (eval-mode dropout is identity)

    key = jax.random.PRNGKey(0)
    key, xkey = jax.random.split(key)
    x = jax.random.normal(xkey, (B, S, hidden_dim), jnp.float32)

    layer_params, fg, fb = init_encoder_params(key, n_layers, hidden_dim, mlp_dim)

    out = encoder_forward(x, layer_params, fg, fb, n_heads)
    out = jax.block_until_ready(out)

    assert out.shape == (B, S, hidden_dim)
    print("KERNEL_OK")
</pallas_src>

<mosaic_0001>
module attributes {stable_mosaic.version = 11 : i64} {
  func.func @transformer_block_kernel(%arg0: i32, %arg1: memref<1x8x32xf32, #tpu.memory_space<vmem>>, %arg2: memref<1x32xf32, #tpu.memory_space<vmem>>, %arg3: memref<1x32xf32, #tpu.memory_space<vmem>>, %arg4: memref<32x32xbf16, #tpu.memory_space<vmem>>, %arg5: memref<1x32xf32, #tpu.memory_space<vmem>>, %arg6: memref<32x32xbf16, #tpu.memory_space<vmem>>, %arg7: memref<1x32xf32, #tpu.memory_space<vmem>>, %arg8: memref<32x32xbf16, #tpu.memory_space<vmem>>, %arg9: memref<1x32xf32, #tpu.memory_space<vmem>>, %arg10: memref<32x32xbf16, #tpu.memory_space<vmem>>, %arg11: memref<1x32xf32, #tpu.memory_space<vmem>>, %arg12: memref<1x32xf32, #tpu.memory_space<vmem>>, %arg13: memref<1x32xf32, #tpu.memory_space<vmem>>, %arg14: memref<32x64xbf16, #tpu.memory_space<vmem>>, %arg15: memref<1x64xf32, #tpu.memory_space<vmem>>, %arg16: memref<64x32xbf16, #tpu.memory_space<vmem>>, %arg17: memref<1x32xf32, #tpu.memory_space<vmem>>, %arg18: memref<1x32xf32, #tpu.memory_space<vmem>>, %arg19: memref<1x32xf32, #tpu.memory_space<vmem>>, %arg20: memref<1x8x32xf32, #tpu.memory_space<vmem>>) attributes {dimension_semantics = [#tpu.dimension_semantics<parallel>], iteration_bounds = array<i64: 2>, scalar_prefetch = 0 : i64, scratch_operands = 0 : i64, tpu.core_type = #tpu.core_type<tc>, window_params = [{transform_indices = @transform_0, window_bounds = array<i64: 1, 8, 32>}, {pipeline_mode = #tpu.pipeline_mode<synchronous>, transform_indices = @transform_1, window_bounds = array<i64: 1, 32>}, {pipeline_mode = #tpu.pipeline_mode<synchronous>, transform_indices = @transform_2, window_bounds = array<i64: 1, 32>}, {pipeline_mode = #tpu.pipeline_mode<synchronous>, transform_indices = @transform_3, window_bounds = array<i64: 32, 32>}, {pipeline_mode = #tpu.pipeline_mode<synchronous>, transform_indices = @transform_4, window_bounds = array<i64: 1, 32>}, {pipeline_mode = #tpu.pipeline_mode<synchronous>, transform_indices = @transform_5, window_bounds = array<i64: 32, 32>}, {pipeline_mode = #tpu.pipeline_mode<synchronous>, transform_indices = @transform_6, window_bounds = array<i64: 1, 32>}, {pipeline_mode = #tpu.pipeline_mode<synchronous>, transform_indices = @transform_7, window_bounds = array<i64: 32, 32>}, {pipeline_mode = #tpu.pipeline_mode<synchronous>, transform_indices = @transform_8, window_bounds = array<i64: 1, 32>}, {pipeline_mode = #tpu.pipeline_mode<synchronous>, transform_indices = @transform_9, window_bounds = array<i64: 32, 32>}, {pipeline_mode = #tpu.pipeline_mode<synchronous>, transform_indices = @transform_10, window_bounds = array<i64: 1, 32>}, {pipeline_mode = #tpu.pipeline_mode<synchronous>, transform_indices = @transform_11, window_bounds = array<i64: 1, 32>}, {pipeline_mode = #tpu.pipeline_mode<synchronous>, transform_indices = @transform_12, window_bounds = array<i64: 1, 32>}, {pipeline_mode = #tpu.pipeline_mode<synchronous>, transform_indices = @transform_13, window_bounds = array<i64: 32, 64>}, {pipeline_mode = #tpu.pipeline_mode<synchronous>, transform_indices = @transform_14, window_bounds = array<i64: 1, 64>}, {pipeline_mode = #tpu.pipeline_mode<synchronous>, transform_indices = @transform_15, window_bounds = array<i64: 64, 32>}, {pipeline_mode = #tpu.pipeline_mode<synchronous>, transform_indices = @transform_16, window_bounds = array<i64: 1, 32>}, {pipeline_mode = #tpu.pipeline_mode<synchronous>, transform_indices = @transform_17, window_bounds = array<i64: 1, 32>}, {pipeline_mode = #tpu.pipeline_mode<synchronous>, transform_indices = @transform_18, window_bounds = array<i64: 1, 32>}, {transform_indices = @transform_19, window_bounds = array<i64: 1, 8, 32>}]} {
    %c0 = arith.constant 0 : index
    %c0_0 = arith.constant 0 : index
    %c0_1 = arith.constant 0 : index
    %0 = vector.load %arg1[%c0, %c0_0, %c0_1] : memref<1x8x32xf32, #tpu.memory_space<vmem>>, vector<1x8x32xf32>
    %1 = vector.shape_cast %0 : vector<1x8x32xf32> to vector<8x32xf32>
    %c0_2 = arith.constant 0 : index
    %c0_3 = arith.constant 0 : index
    %2 = vector.load %arg2[%c0_2, %c0_3] : memref<1x32xf32, #tpu.memory_space<vmem>>, vector<1x32xf32>
    %3 = vector.shape_cast %2 : vector<1x32xf32> to vector<32xf32>
    %c0_4 = arith.constant 0 : index
    %c0_5 = arith.constant 0 : index
    %4 = vector.load %arg3[%c0_4, %c0_5] : memref<1x32xf32, #tpu.memory_space<vmem>>, vector<1x32xf32>
    %5 = vector.shape_cast %4 : vector<1x32xf32> to vector<32xf32>
    %cst = arith.constant dense<0.000000e+00> : vector<8xf32>
    %6 = vector.multi_reduction <add>, %1, %cst [1] : vector<8x32xf32> to vector<8xf32>
    %7 = vector.shape_cast %6 : vector<8xf32> to vector<8x1xf32>
    %cst_6 = arith.constant 3.200000e+01 : f32
    %8 = vector.broadcast %cst_6 : f32 to vector<8x1xf32>
    %9 = arith.divf %7, %8 : vector<8x1xf32>
    %10 = vector.broadcast %9 : vector<8x1xf32> to vector<8x32xf32>
    %11 = arith.subf %1, %10 : vector<8x32xf32>
    %12 = vector.broadcast %9 : vector<8x1xf32> to vector<8x32xf32>
    %13 = arith.subf %1, %12 : vector<8x32xf32>
    %14 = arith.mulf %11, %13 : vector<8x32xf32>
    %cst_7 = arith.constant dense<0.000000e+00> : vector<8xf32>
    %15 = vector.multi_reduction <add>, %14, %cst_7 [1] : vector<8x32xf32> to vector<8xf32>
    %16 = vector.shape_cast %15 : vector<8xf32> to vector<8x1xf32>
    %cst_8 = arith.constant 3.200000e+01 : f32
    %17 = vector.broadcast %cst_8 : f32 to vector<8x1xf32>
    %18 = arith.divf %16, %17 : vector<8x1xf32>
    %19 = vector.broadcast %9 : vector<8x1xf32> to vector<8x32xf32>
    %20 = arith.subf %1, %19 : vector<8x32xf32>
    %cst_9 = arith.constant 9.99999997E-7 : f32
    %21 = vector.broadcast %cst_9 : f32 to vector<8x1xf32>
    %22 = arith.addf %18, %21 : vector<8x1xf32>
    %23 = math.rsqrt %22 : vector<8x1xf32>
    %24 = vector.broadcast %23 : vector<8x1xf32> to vector<8x32xf32>
    %25 = arith.mulf %20, %24 : vector<8x32xf32>
    %26 = vector.shape_cast %3 : vector<32xf32> to vector<1x32xf32>
    %27 = vector.broadcast %26 : vector<1x32xf32> to vector<8x32xf32>
    %28 = arith.mulf %25, %27 : vector<8x32xf32>
    %29 = vector.shape_cast %5 : vector<32xf32> to vector<1x32xf32>
    %30 = vector.broadcast %29 : vector<1x32xf32> to vector<8x32xf32>
    %31 = arith.addf %28, %30 : vector<8x32xf32>
    %32 = arith.truncf %31 : vector<8x32xf32> to vector<8x32xbf16>
    %c0_10 = arith.constant 0 : index
    %c0_11 = arith.constant 0 : index
    %33 = vector.load %arg4[%c0_10, %c0_11] : memref<32x32xbf16, #tpu.memory_space<vmem>>, vector<32x32xbf16>
    %cst_12 = arith.constant dense<0.000000e+00> : vector<8x32xf32>
    %34 = tpu.matmul %32, %33, %cst_12 {dimension_numbers = #tpu.dot_dimension_numbers<[1], [0], [0], [1], [0, 0, 1, 1], [], []>} : vector<8x32xbf16>, vector<32x32xbf16>, vector<8x32xf32> -> vector<8x32xf32>
    %c0_13 = arith.constant 0 : index
    %c0_14 = arith.constant 0 : index
    %35 = vector.load %arg5[%c0_13, %c0_14] : memref<1x32xf32, #tpu.memory_space<vmem>>, vector<1x32xf32>
    %36 = vector.shape_cast %35 : vector<1x32xf32> to vector<32xf32>
    %37 = vector.shape_cast %36 : vector<32xf32> to vector<1x32xf32>
    %38 = vector.broadcast %37 : vector<1x32xf32> to vector<8x32xf32>
    %39 = arith.addf %34, %38 : vector<8x32xf32>
    %c0_15 = arith.constant 0 : index
    %c0_16 = arith.constant 0 : index
    %40 = vector.load %arg6[%c0_15, %c0_16] : memref<32x32xbf16, #tpu.memory_space<vmem>>, vector<32x32xbf16>
    %cst_17 = arith.constant dense<0.000000e+00> : vector<8x32xf32>
    %41 = tpu.matmul %32, %40, %cst_17 {dimension_numbers = #tpu.dot_dimension_numbers<[1], [0], [0], [1], [0, 0, 1, 1], [], []>} : vector<8x32xbf16>, vector<32x32xbf16>, vector<8x32xf32> -> vector<8x32xf32>
    %c0_18 = arith.constant 0 : index
    %c0_19 = arith.constant 0 : index
    %42 = vector.load %arg7[%c0_18, %c0_19] : memref<1x32xf32, #tpu.memory_space<vmem>>, vector<1x32xf32>
    %43 = vector.shape_cast %42 : vector<1x32xf32> to vector<32xf32>
    %44 = vector.shape_cast %43 : vector<32xf32> to vector<1x32xf32>
    %45 = vector.broadcast %44 : vector<1x32xf32> to vector<8x32xf32>
    %46 = arith.addf %41, %45 : vector<8x32xf32>
    %c0_20 = arith.constant 0 : index
    %c0_21 = arith.constant 0 : index
    %47 = vector.load %arg8[%c0_20, %c0_21] : memref<32x32xbf16, #tpu.memory_space<vmem>>, vector<32x32xbf16>
    %cst_22 = arith.constant dense<0.000000e+00> : vector<8x32xf32>
    %48 = tpu.matmul %32, %47, %cst_22 {dimension_numbers = #tpu.dot_dimension_numbers<[1], [0], [0], [1], [0, 0, 1, 1], [], []>} : vector<8x32xbf16>, vector<32x32xbf16>, vector<8x32xf32> -> vector<8x32xf32>
    %c0_23 = arith.constant 0 : index
    %c0_24 = arith.constant 0 : index
    %49 = vector.load %arg9[%c0_23, %c0_24] : memref<1x32xf32, #tpu.memory_space<vmem>>, vector<1x32xf32>
    %50 = vector.shape_cast %49 : vector<1x32xf32> to vector<32xf32>
    %51 = vector.shape_cast %50 : vector<32xf32> to vector<1x32xf32>
    %52 = vector.broadcast %51 : vector<1x32xf32> to vector<8x32xf32>
    %53 = arith.addf %48, %52 : vector<8x32xf32>
    %54 = arith.truncf %39 : vector<8x32xf32> to vector<8x32xbf16>
    %55 = vector.extract_strided_slice %54 {offsets = [0, 0], sizes = [8, 8], strides = [1, 1]} : vector<8x32xbf16> to vector<8x8xbf16>
    %56 = vector.extract_strided_slice %54 {offsets = [0, 8], sizes = [8, 8], strides = [1, 1]} : vector<8x32xbf16> to vector<8x8xbf16>
    %57 = vector.extract_strided_slice %54 {offsets = [0, 16], sizes = [8, 8], strides = [1, 1]} : vector<8x32xbf16> to vector<8x8xbf16>
    %58 = vector.extract_strided_slice %54 {offsets = [0, 24], sizes = [8, 8], strides = [1, 1]} : vector<8x32xbf16> to vector<8x8xbf16>
    %59 = vector.shape_cast %55 : vector<8x8xbf16> to vector<1x8x8xbf16>
    %60 = vector.shape_cast %56 : vector<8x8xbf16> to vector<1x8x8xbf16>
    %61 = vector.shape_cast %57 : vector<8x8xbf16> to vector<1x8x8xbf16>
    %62 = vector.shape_cast %58 : vector<8x8xbf16> to vector<1x8x8xbf16>
    %63 = tpu.concatenate %59, %60, %61, %62 in 0 : vector<1x8x8xbf16>, vector<1x8x8xbf16>, vector<1x8x8xbf16>, vector<1x8x8xbf16> -> vector<4x8x8xbf16>
    %64 = arith.truncf %46 : vector<8x32xf32> to vector<8x32xbf16>
    %65 = vector.extract_strided_slice %64 {offsets = [0, 0], sizes = [8, 8], strides = [1, 1]} : vector<8x32xbf16> to vector<8x8xbf16>
    %66 = vector.extract_strided_slice %64 {offsets = [0, 8], sizes = [8, 8], strides = [1, 1]} : vector<8x32xbf16> to vector<8x8xbf16>
    %67 = vector.extract_strided_slice %64 {offsets = [0, 16], sizes = [8, 8], strides = [1, 1]} : vector<8x32xbf16> to vector<8x8xbf16>
    %68 = vector.extract_strided_slice %64 {offsets = [0, 24], sizes = [8, 8], strides = [1, 1]} : vector<8x32xbf16> to vector<8x8xbf16>
    %69 = vector.shape_cast %65 : vector<8x8xbf16> to vector<1x8x8xbf16>
    %70 = vector.shape_cast %66 : vector<8x8xbf16> to vector<1x8x8xbf16>
    %71 = vector.shape_cast %67 : vector<8x8xbf16> to vector<1x8x8xbf16>
    %72 = vector.shape_cast %68 : vector<8x8xbf16> to vector<1x8x8xbf16>
    %73 = tpu.concatenate %69, %70, %71, %72 in 0 : vector<1x8x8xbf16>, vector<1x8x8xbf16>, vector<1x8x8xbf16>, vector<1x8x8xbf16> -> vector<4x8x8xbf16>
    %74 = arith.truncf %53 : vector<8x32xf32> to vector<8x32xbf16>
    %75 = vector.extract_strided_slice %74 {offsets = [0, 0], sizes = [8, 8], strides = [1, 1]} : vector<8x32xbf16> to vector<8x8xbf16>
    %76 = vector.extract_strided_slice %74 {offsets = [0, 8], sizes = [8, 8], strides = [1, 1]} : vector<8x32xbf16> to vector<8x8xbf16>
    %77 = vector.extract_strided_slice %74 {offsets = [0, 16], sizes = [8, 8], strides = [1, 1]} : vector<8x32xbf16> to vector<8x8xbf16>
    %78 = vector.extract_strided_slice %74 {offsets = [0, 24], sizes = [8, 8], strides = [1, 1]} : vector<8x32xbf16> to vector<8x8xbf16>
    %79 = vector.shape_cast %75 : vector<8x8xbf16> to vector<1x8x8xbf16>
    %80 = vector.shape_cast %76 : vector<8x8xbf16> to vector<1x8x8xbf16>
    %81 = vector.shape_cast %77 : vector<8x8xbf16> to vector<1x8x8xbf16>
    %82 = vector.shape_cast %78 : vector<8x8xbf16> to vector<1x8x8xbf16>
    %83 = tpu.concatenate %79, %80, %81, %82 in 0 : vector<1x8x8xbf16>, vector<1x8x8xbf16>, vector<1x8x8xbf16>, vector<1x8x8xbf16> -> vector<4x8x8xbf16>
    "tpu.trace_start"() <{level = 10 : i32, message = "hqd,hkd->hqk"}> : () -> ()
    %cst_25 = arith.constant dense<0.000000e+00> : vector<4x8x8xf32>
    %84 = tpu.matmul %63, %73, %cst_25 {dimension_numbers = #tpu.dot_dimension_numbers<[2], [2], [1], [1], [0, 0, 0, 1, 1, 1], [0], [0]>} : vector<4x8x8xbf16>, vector<4x8x8xbf16>, vector<4x8x8xf32> -> vector<4x8x8xf32>
    "tpu.trace_stop"() : () -> ()
    %cst_26 = arith.constant 0.353553385 : f32
    %85 = vector.broadcast %cst_26 : f32 to vector<4x8x8xf32>
    %86 = arith.mulf %84, %85 : vector<4x8x8xf32>
    %cst_27 = arith.constant dense<0xFF800000> : vector<4x8xf32>
    %87 = vector.multi_reduction <maximumf>, %86, %cst_27 [2] : vector<4x8x8xf32> to vector<4x8xf32>
    %88 = vector.shape_cast %87 : vector<4x8xf32> to vector<4x8x1xf32>
    %89 = vector.broadcast %88 : vector<4x8x1xf32> to vector<4x8x8xf32>
    %90 = arith.subf %86, %89 : vector<4x8x8xf32>
    %91 = math.exp %90 : vector<4x8x8xf32>
    %cst_28 = arith.constant dense<0.000000e+00> : vector<4x8xf32>
    %92 = vector.multi_reduction <add>, %91, %cst_28 [2] : vector<4x8x8xf32> to vector<4x8xf32>
    %93 = vector.shape_cast %92 : vector<4x8xf32> to vector<4x8x1xf32>
    %94 = tpu.reciprocal %93 {approx = true} : vector<4x8x1xf32> -> vector<4x8x1xf32>
    %95 = vector.broadcast %94 : vector<4x8x1xf32> to vector<4x8x8xf32>
    %96 = arith.mulf %91, %95 : vector<4x8x8xf32>
    %97 = arith.truncf %96 : vector<4x8x8xf32> to vector<4x8x8xbf16>
    "tpu.trace_start"() <{level = 10 : i32, message = "hqk,hkd->hqd"}> : () -> ()
    %cst_29 = arith.constant dense<0.000000e+00> : vector<4x8x8xf32>
    %98 = tpu.matmul %97, %83, %cst_29 {dimension_numbers = #tpu.dot_dimension_numbers<[2], [1], [1], [2], [0, 0, 0, 1, 1, 2], [0], [0]>} : vector<4x8x8xbf16>, vector<4x8x8xbf16>, vector<4x8x8xf32> -> vector<4x8x8xf32>
    "tpu.trace_stop"() : () -> ()
    %99 = vector.extract_strided_slice %98 {offsets = [0, 0, 0], sizes = [1, 8, 8], strides = [1, 1, 1]} : vector<4x8x8xf32> to vector<1x8x8xf32>
    %100 = vector.shape_cast %99 : vector<1x8x8xf32> to vector<8x8xf32>
    %101 = vector.extract_strided_slice %98 {offsets = [1, 0, 0], sizes = [1, 8, 8], strides = [1, 1, 1]} : vector<4x8x8xf32> to vector<1x8x8xf32>
    %102 = vector.shape_cast %101 : vector<1x8x8xf32> to vector<8x8xf32>
    %103 = vector.extract_strided_slice %98 {offsets = [2, 0, 0], sizes = [1, 8, 8], strides = [1, 1, 1]} : vector<4x8x8xf32> to vector<1x8x8xf32>
    %104 = vector.shape_cast %103 : vector<1x8x8xf32> to vector<8x8xf32>
    %105 = vector.extract_strided_slice %98 {offsets = [3, 0, 0], sizes = [1, 8, 8], strides = [1, 1, 1]} : vector<4x8x8xf32> to vector<1x8x8xf32>
    %106 = vector.shape_cast %105 : vector<1x8x8xf32> to vector<8x8xf32>
    %107 = tpu.concatenate %100, %102, %104, %106 in 1 : vector<8x8xf32>, vector<8x8xf32>, vector<8x8xf32>, vector<8x8xf32> -> vector<8x32xf32>
    %108 = arith.truncf %107 : vector<8x32xf32> to vector<8x32xbf16>
    %c0_30 = arith.constant 0 : index
    %c0_31 = arith.constant 0 : index
    %109 = vector.load %arg10[%c0_30, %c0_31] : memref<32x32xbf16, #tpu.memory_space<vmem>>, vector<32x32xbf16>
    %cst_32 = arith.constant dense<0.000000e+00> : vector<8x32xf32>
    %110 = tpu.matmul %108, %109, %cst_32 {dimension_numbers = #tpu.dot_dimension_numbers<[1], [0], [0], [1], [0, 0, 1, 1], [], []>} : vector<8x32xbf16>, vector<32x32xbf16>, vector<8x32xf32> -> vector<8x32xf32>
    %c0_33 = arith.constant 0 : index
    %c0_34 = arith.constant 0 : index
    %111 = vector.load %arg11[%c0_33, %c0_34] : memref<1x32xf32, #tpu.memory_space<vmem>>, vector<1x32xf32>
    %112 = vector.shape_cast %111 : vector<1x32xf32> to vector<32xf32>
    %113 = vector.shape_cast %112 : vector<32xf32> to vector<1x32xf32>
    %114 = vector.broadcast %113 : vector<1x32xf32> to vector<8x32xf32>
    %115 = arith.addf %110, %114 : vector<8x32xf32>
    %116 = arith.addf %1, %115 : vector<8x32xf32>
    %c0_35 = arith.constant 0 : index
    %c0_36 = arith.constant 0 : index
    %117 = vector.load %arg12[%c0_35, %c0_36] : memref<1x32xf32, #tpu.memory_space<vmem>>, vector<1x32xf32>
    %118 = vector.shape_cast %117 : vector<1x32xf32> to vector<32xf32>
    %c0_37 = arith.constant 0 : index
    %c0_38 = arith.constant 0 : index
    %119 = vector.load %arg13[%c0_37, %c0_38] : memref<1x32xf32, #tpu.memory_space<vmem>>, vector<1x32xf32>
    %120 = vector.shape_cast %119 : vector<1x32xf32> to vector<32xf32>
    %cst_39 = arith.constant dense<0.000000e+00> : vector<8xf32>
    %121 = vector.multi_reduction <add>, %116, %cst_39 [1] : vector<8x32xf32> to vector<8xf32>
    %122 = vector.shape_cast %121 : vector<8xf32> to vector<8x1xf32>
    %cst_40 = arith.constant 3.200000e+01 : f32
    %123 = vector.broadcast %cst_40 : f32 to vector<8x1xf32>
    %124 = arith.divf %122, %123 : vector<8x1xf32>
    %125 = vector.broadcast %124 : vector<8x1xf32> to vector<8x32xf32>
    %126 = arith.subf %116, %125 : vector<8x32xf32>
    %127 = vector.broadcast %124 : vector<8x1xf32> to vector<8x32xf32>
    %128 = arith.subf %116, %127 : vector<8x32xf32>
    %129 = arith.mulf %126, %128 : vector<8x32xf32>
    %cst_41 = arith.constant dense<0.000000e+00> : vector<8xf32>
    %130 = vector.multi_reduction <add>, %129, %cst_41 [1] : vector<8x32xf32> to vector<8xf32>
    %131 = vector.shape_cast %130 : vector<8xf32> to vector<8x1xf32>
    %cst_42 = arith.constant 3.200000e+01 : f32
    %132 = vector.broadcast %cst_42 : f32 to vector<8x1xf32>
    %133 = arith.divf %131, %132 : vector<8x1xf32>
    %134 = vector.broadcast %124 : vector<8x1xf32> to vector<8x32xf32>
    %135 = arith.subf %116, %134 : vector<8x32xf32>
    %cst_43 = arith.constant 9.99999997E-7 : f32
    %136 = vector.broadcast %cst_43 : f32 to vector<8x1xf32>
    %137 = arith.addf %133, %136 : vector<8x1xf32>
    %138 = math.rsqrt %137 : vector<8x1xf32>
    %139 = vector.broadcast %138 : vector<8x1xf32> to vector<8x32xf32>
    %140 = arith.mulf %135, %139 : vector<8x32xf32>
    %141 = vector.shape_cast %118 : vector<32xf32> to vector<1x32xf32>
    %142 = vector.broadcast %141 : vector<1x32xf32> to vector<8x32xf32>
    %143 = arith.mulf %140, %142 : vector<8x32xf32>
    %144 = vector.shape_cast %120 : vector<32xf32> to vector<1x32xf32>
    %145 = vector.broadcast %144 : vector<1x32xf32> to vector<8x32xf32>
    %146 = arith.addf %143, %145 : vector<8x32xf32>
    %147 = arith.truncf %146 : vector<8x32xf32> to vector<8x32xbf16>
    %c0_44 = arith.constant 0 : index
    %c0_45 = arith.constant 0 : index
    %148 = vector.load %arg14[%c0_44, %c0_45] : memref<32x64xbf16, #tpu.memory_space<vmem>>, vector<32x64xbf16>
    %cst_46 = arith.constant dense<0.000000e+00> : vector<8x64xf32>
    %149 = tpu.matmul %147, %148, %cst_46 {dimension_numbers = #tpu.dot_dimension_numbers<[1], [0], [0], [1], [0, 0, 1, 1], [], []>} : vector<8x32xbf16>, vector<32x64xbf16>, vector<8x64xf32> -> vector<8x64xf32>
    %c0_47 = arith.constant 0 : index
    %c0_48 = arith.constant 0 : index
    %150 = vector.load %arg15[%c0_47, %c0_48] : memref<1x64xf32, #tpu.memory_space<vmem>>, vector<1x64xf32>
    %151 = vector.shape_cast %150 : vector<1x64xf32> to vector<64xf32>
    %152 = vector.shape_cast %151 : vector<64xf32> to vector<1x64xf32>
    %153 = vector.broadcast %152 : vector<1x64xf32> to vector<8x64xf32>
    %154 = arith.addf %149, %153 : vector<8x64xf32>
    %cst_49 = arith.constant 5.000000e-01 : f32
    %155 = vector.broadcast %cst_49 : f32 to vector<8x64xf32>
    %156 = arith.mulf %155, %154 : vector<8x64xf32>
    %cst_50 = arith.constant 0.707106769 : f32
    %157 = vector.broadcast %cst_50 : f32 to vector<8x64xf32>
    %158 = arith.mulf %154, %157 : vector<8x64xf32>
    %159 = math.erf %158 : vector<8x64xf32>
    %cst_51 = arith.constant 1.000000e+00 : f32
    %160 = vector.broadcast %cst_51 : f32 to vector<8x64xf32>
    %161 = arith.addf %160, %159 : vector<8x64xf32>
    %162 = arith.mulf %156, %161 : vector<8x64xf32>
    %163 = arith.truncf %162 : vector<8x64xf32> to vector<8x64xbf16>
    %c0_52 = arith.constant 0 : index
    %c0_53 = arith.constant 0 : index
    %164 = vector.load %arg16[%c0_52, %c0_53] : memref<64x32xbf16, #tpu.memory_space<vmem>>, vector<64x32xbf16>
    %cst_54 = arith.constant dense<0.000000e+00> : vector<8x32xf32>
    %165 = tpu.matmul %163, %164, %cst_54 {dimension_numbers = #tpu.dot_dimension_numbers<[1], [0], [0], [1], [0, 0, 1, 1], [], []>} : vector<8x64xbf16>, vector<64x32xbf16>, vector<8x32xf32> -> vector<8x32xf32>
    %c0_55 = arith.constant 0 : index
    %c0_56 = arith.constant 0 : index
    %166 = vector.load %arg17[%c0_55, %c0_56] : memref<1x32xf32, #tpu.memory_space<vmem>>, vector<1x32xf32>
    %167 = vector.shape_cast %166 : vector<1x32xf32> to vector<32xf32>
    %168 = vector.shape_cast %167 : vector<32xf32> to vector<1x32xf32>
    %169 = vector.broadcast %168 : vector<1x32xf32> to vector<8x32xf32>
    %170 = arith.addf %165, %169 : vector<8x32xf32>
    %171 = arith.addf %116, %170 : vector<8x32xf32>
    %c0_57 = arith.constant 0 : index
    %c0_58 = arith.constant 0 : index
    %c0_59 = arith.constant 0 : index
    %172 = vector.load %arg20[%c0_57, %c0_58, %c0_59] : memref<1x8x32xf32, #tpu.memory_space<vmem>>, vector<1x8x32xf32>
    %173 = vector.shape_cast %172 : vector<1x8x32xf32> to vector<8x32xf32>
    %174 = vector.shape_cast %171 : vector<8x32xf32> to vector<1x8x32xf32>
    tpu.vector_store %arg20[%c0_57, %c0_58, %c0_59], %174 {strides = array<i32>} : memref<1x8x32xf32, #tpu.memory_space<vmem>>, vector<1x8x32xf32>,
    return
  }
  func.func @transform_0(%arg0: i32) -> (i32, i32, i32) {
    %c0_i32 = arith.constant 0 : i32
    %c0_i32_0 = arith.constant 0 : i32
    %c0_i32_1 = arith.constant 0 : i32
    return %arg0, %c0_i32, %c0_i32_0 : i32, i32, i32
  }
  func.func @transform_1(%arg0: i32) -> (i32, i32) {
    %c0_i32 = arith.constant 0 : i32
    %c0_i32_0 = arith.constant 0 : i32
    %c0_i32_1 = arith.constant 0 : i32
    return %c0_i32, %c0_i32_0 : i32, i32
  }
  func.func @transform_2(%arg0: i32) -> (i32, i32) {
    %c0_i32 = arith.constant 0 : i32
    %c0_i32_0 = arith.constant 0 : i32
    %c0_i32_1 = arith.constant 0 : i32
    return %c0_i32, %c0_i32_0 : i32, i32
  }
  func.func @transform_3(%arg0: i32) -> (i32, i32) {
    %c0_i32 = arith.constant 0 : i32
    %c0_i32_0 = arith.constant 0 : i32
    %c0_i32_1 = arith.constant 0 : i32
    return %c0_i32, %c0_i32_0 : i32, i32
  }
  func.func @transform_4(%arg0: i32) -> (i32, i32) {
    %c0_i32 = arith.constant 0 : i32
    %c0_i32_0 = arith.constant 0 : i32
    %c0_i32_1 = arith.constant 0 : i32
    return %c0_i32, %c0_i32_0 : i32, i32
  }
  func.func @transform_5(%arg0: i32) -> (i32, i32) {
    %c0_i32 = arith.constant 0 : i32
    %c0_i32_0 = arith.constant 0 : i32
    %c0_i32_1 = arith.constant 0 : i32
    return %c0_i32, %c0_i32_0 : i32, i32
  }
  func.func @transform_6(%arg0: i32) -> (i32, i32) {
    %c0_i32 = arith.constant 0 : i32
    %c0_i32_0 = arith.constant 0 : i32
    %c0_i32_1 = arith.constant 0 : i32
    return %c0_i32, %c0_i32_0 : i32, i32
  }
  func.func @transform_7(%arg0: i32) -> (i32, i32) {
    %c0_i32 = arith.constant 0 : i32
    %c0_i32_0 = arith.constant 0 : i32
    %c0_i32_1 = arith.constant 0 : i32
    return %c0_i32, %c0_i32_0 : i32, i32
  }
  func.func @transform_8(%arg0: i32) -> (i32, i32) {
    %c0_i32 = arith.constant 0 : i32
    %c0_i32_0 = arith.constant 0 : i32
    %c0_i32_1 = arith.constant 0 : i32
    return %c0_i32, %c0_i32_0 : i32, i32
  }
  func.func @transform_9(%arg0: i32) -> (i32, i32) {
    %c0_i32 = arith.constant 0 : i32
    %c0_i32_0 = arith.constant 0 : i32
    %c0_i32_1 = arith.constant 0 : i32
    return %c0_i32, %c0_i32_0 : i32, i32
  }
  func.func @transform_10(%arg0: i32) -> (i32, i32) {
    %c0_i32 = arith.constant 0 : i32
    %c0_i32_0 = arith.constant 0 : i32
    %c0_i32_1 = arith.constant 0 : i32
    return %c0_i32, %c0_i32_0 : i32, i32
  }
  func.func @transform_11(%arg0: i32) -> (i32, i32) {
    %c0_i32 = arith.constant 0 : i32
    %c0_i32_0 = arith.constant 0 : i32
    %c0_i32_1 = arith.constant 0 : i32
    return %c0_i32, %c0_i32_0 : i32, i32
  }
  func.func @transform_12(%arg0: i32) -> (i32, i32) {
    %c0_i32 = arith.constant 0 : i32
    %c0_i32_0 = arith.constant 0 : i32
    %c0_i32_1 = arith.constant 0 : i32
    return %c0_i32, %c0_i32_0 : i32, i32
  }
  func.func @transform_13(%arg0: i32) -> (i32, i32) {
    %c0_i32 = arith.constant 0 : i32
    %c0_i32_0 = arith.constant 0 : i32
    %c0_i32_1 = arith.constant 0 : i32
    return %c0_i32, %c0_i32_0 : i32, i32
  }
  func.func @transform_14(%arg0: i32) -> (i32, i32) {
    %c0_i32 = arith.constant 0 : i32
    %c0_i32_0 = arith.constant 0 : i32
    %c0_i32_1 = arith.constant 0 : i32
    return %c0_i32, %c0_i32_0 : i32, i32
  }
  func.func @transform_15(%arg0: i32) -> (i32, i32) {
    %c0_i32 = arith.constant 0 : i32
    %c0_i32_0 = arith.constant 0 : i32
    %c0_i32_1 = arith.constant 0 : i32
    return %c0_i32, %c0_i32_0 : i32, i32
  }
  func.func @transform_16(%arg0: i32) -> (i32, i32) {
    %c0_i32 = arith.constant 0 : i32
    %c0_i32_0 = arith.constant 0 : i32
    %c0_i32_1 = arith.constant 0 : i32
    return %c0_i32, %c0_i32_0 : i32, i32
  }
  func.func @transform_17(%arg0: i32) -> (i32, i32) {
    %c0_i32 = arith.constant 0 : i32
    %c0_i32_0 = arith.constant 0 : i32
    %c0_i32_1 = arith.constant 0 : i32
    return %c0_i32, %c0_i32_0 : i32, i32
  }
  func.func @transform_18(%arg0: i32) -> (i32, i32) {
    %c0_i32 = arith.constant 0 : i32
    %c0_i32_0 = arith.constant 0 : i32
    %c0_i32_1 = arith.constant 0 : i32
    return %c0_i32, %c0_i32_0 : i32, i32
  }
  func.func @transform_19(%arg0: i32) -> (i32, i32, i32) {
    %c0_i32 = arith.constant 0 : i32
    %c0_i32_0 = arith.constant 0 : i32
    %c0_i32_1 = arith.constant 0 : i32
    return %arg0, %c0_i32, %c0_i32_0 : i32, i32, i32
  }
}

</mosaic_0001>

<llo_original>
// kernel: tpu_custom_call.1
$region0: #{tpu_custom_call.1}
  #allocation0 [shape = 'u32[]', space=smem, size = 0x4, offset = 0x4, fixed_abs, tag = 'smem constant byte address 0x4 - core index']
  #allocation1 [shape = 'u32[72,128]{1,0:T(1,128)}', space=vmem, size = 0x9000, scoped, tag = 'internal scratch']
  %s0 = inlined_call_operand.vmem [shape: f32[2,8,32], index: 0, kind: input, shape index: {}]
  %s1 = inlined_call_operand.hbm [shape: f32[1,32], index: 1, kind: input, shape index: {}]
  %s2 = inlined_call_operand.vmem [shape: f32[1,32], index: 2, kind: input, shape index: {}]
  %s3 = inlined_call_operand.vmem [shape: bf16[32,32], index: 3, kind: input, shape index: {}]
  %s4 = inlined_call_operand.vmem [shape: f32[1,32], index: 4, kind: input, shape index: {}]
  %s5 = inlined_call_operand.vmem [shape: bf16[32,32], index: 5, kind: input, shape index: {}]
  %s6 = inlined_call_operand.vmem [shape: f32[1,32], index: 6, kind: input, shape index: {}]
  %s7 = inlined_call_operand.hbm [shape: bf16[32,32], index: 7, kind: input, shape index: {}]
  %s8 = inlined_call_operand.vmem [shape: f32[1,32], index: 8, kind: input, shape index: {}]
  %s9 = inlined_call_operand.hbm [shape: bf16[32,32], index: 9, kind: input, shape index: {}]
  %s10 = inlined_call_operand.vmem [shape: f32[1,32], index: 10, kind: input, shape index: {}]
  %s11 = inlined_call_operand.vmem [shape: f32[1,32], index: 11, kind: input, shape index: {}]
  %s12 = inlined_call_operand.vmem [shape: f32[1,32], index: 12, kind: input, shape index: {}]
  %s13 = inlined_call_operand.hbm [shape: bf16[32,64], index: 13, kind: input, shape index: {}]
  %s14 = inlined_call_operand.vmem [shape: f32[1,64], index: 14, kind: input, shape index: {}]
  %s15 = inlined_call_operand.vmem [shape: bf16[64,32], index: 15, kind: input, shape index: {}]
  %s16 = inlined_call_operand.vmem [shape: f32[1,32], index: 16, kind: input, shape index: {}]
  %s17 = inlined_call_operand.vmem [shape: f32[1,32], index: 17, kind: input, shape index: {}]
  %s18 = inlined_call_operand.vmem [shape: f32[1,32], index: 18, kind: input, shape index: {}]
  %s19 = inlined_call_operand.hbm [shape: f32[2,8,32], index: 19, kind: output, shape index: {}]
  %s20 = sld [smem:[#allocation0]]
  $region125: #{tpu_custom_call.1} parent=0
    _
  %s22 = ssub.s32 1, %s20
  %s23 = scalar_select 0, %s22, %s20
  $region1: #{tpu_custom_call.1} parent=0
    #allocation2 [shape = 'u8[512]{0}', space=vmem, size = 0x400, scoped, tag = 'input window, operand 1, single buffered']
    #allocation3 [shape = 's32[2]{0}', space=sflag, size = 0x8, scoped, tag = 'scoped memory for tpu_custom_call.1']
    #allocation4 [shape = 's32[2]{0}', space=sflag, size = 0x8, scoped, tag = 'scoped memory for tpu_custom_call.1']
    #allocation5 [shape = 'u8[8192]{0}', space=vmem, size = 0x2000, scoped, tag = 'input window, operand 7, single buffered']
    #allocation6 [shape = 's32[1]{0}', space=sflag, size = 0x4, scoped, tag = 'scoped memory for tpu_custom_call.1']
    #allocation7 [shape = 'u8[8192]{0}', space=vmem, size = 0x2000, scoped, tag = 'input window, operand 9, single buffered']
    #allocation8 [shape = 'u8[8192]{0}', space=vmem, size = 0x2000, scoped, tag = 'input window, operand 13, single buffered']
    #allocation9 [shape = 's32[1]{0}', space=sflag, size = 0x4, scoped, tag = 'scoped memory for tpu_custom_call.1']
    #allocation10 [shape = 'u8[8192]{0}', space=vmem, size = 0x2000, scoped, tag = 'output window, operand 0']
    %24 = vsyncpa [#allocation3], 0
    %25 = vsyncpa [#allocation6], 0
    %26 = vsyncpa [#allocation9], 0
    %27 = vsyncpa [#allocation4], 0
    %s28 = scalar_lea.sflag [#allocation4], 1
    %29 = vsyncpa %s28, 0
    loop: start=0, step=1, limit=4
    $region2: #{tpu_custom_call.1} parent=1 // loop_pre_header
      _
    $region3: #{tpu_custom_call.1} parent=1 // loop_header
      %s31 = sphi 0, %s35
      %p32 = scmp.ge.s32.totalorder %s31, 4
      %s41 = sphi 0, %s43
      %s44 = sphi 0, %s41
      %s45 = sphi 0, %s44
      %s61 = sphi 0, %s45
      %s65 = sphi 0, %s65
      %s67 = sphi 0, %s65
      %s68 = sphi 0, %s67
      %s82 = sphi 0, %s68
      %s86 = sphi 0, %s86
      %s88 = sphi 0, %s86
      %s89 = sphi 0, %s88
      %s103 = sphi 0, %s89
      %s107 = sphi 0, %s107
      %s109 = sphi 0, %s107
      %s110 = sphi 0, %s109
      %s124 = sphi 0, %s110
      %s128 = sphi 0, %s128
      %s130 = sphi 0, %s128
      %s131 = sphi 0, %s130
      %s145 = sphi 0, %s131
      %s149 = sphi 0, %s149
      %s151 = sphi 0, %s149
      %s152 = sphi 0, %s151
      %s166 = sphi 0, %s152
      %s170 = sphi 0, %s170
      %s172 = sphi 0, %s170
      %s173 = sphi 0, %s172
      %s187 = sphi 0, %s173
      %s191 = sphi 0, %s191
      %s193 = sphi 0, %s191
      %s194 = sphi 0, %s193
      %s208 = sphi 0, %s194
      %s212 = sphi 0, %s212
      %s214 = sphi 0, %s212
      %s215 = sphi 0, %s214
      %s229 = sphi 0, %s215
      %s233 = sphi 0, %s233
      %s235 = sphi 0, %s233
      %s236 = sphi 0, %s235
      %s250 = sphi 0, %s236
      %s254 = sphi 0, %s254
      %s256 = sphi 0, %s254
      %s257 = sphi 0, %s256
      %s271 = sphi 0, %s257
      %s275 = sphi 0, %s275
      %s277 = sphi 0, %s275
      %s278 = sphi 0, %s277
      %s292 = sphi 0, %s278
      %s296 = sphi 0, %s296
      %s298 = sphi 0, %s296
      %s299 = sphi 0, %s298
      %s313 = sphi 0, %s299
      %s317 = sphi 0, %s317
      %s319 = sphi 0, %s317
      %s320 = sphi 0, %s319
      %s334 = sphi 0, %s320
      %s338 = sphi 0, %s338
      %s340 = sphi 0, %s338
      %s341 = sphi 0, %s340
      %s355 = sphi 0, %s341
      %s359 = sphi 0, %s359
      %s361 = sphi 0, %s359
      %s362 = sphi 0, %s361
      %s376 = sphi 0, %s362
      %s380 = sphi 0, %s380
      %s382 = sphi 0, %s380
      %s383 = sphi 0, %s382
      %s397 = sphi 0, %s383
      %s401 = sphi 0, %s401
      %s403 = sphi 0, %s401
      %s404 = sphi 0, %s403
      %s418 = sphi 0, %s404
      %s422 = sphi 0, %s422
      %s424 = sphi 0, %s422
      %s425 = sphi 0, %s424
      %s439 = sphi 0, %s425
      %s445 = sphi 0, %s447
      %s448 = sphi 0, %s445
      %s449 = sphi 0, %s448
      %s465 = sphi 0, %s449
    $region4: #{tpu_custom_call.1} parent=1 // loop_header_branch
      %34 = sbr.rel (%p32) target = $region8
    $region5: #{tpu_custom_call.1} parent=1 // loop_body
      %s36 = ssub.s32 %s31, 1
      %s37 = ssub.s32 %s31, 2
      %s38 = sadd.s32 %s31, 1
      %s39 = ssub.s32 %s31, %s38
      %p40 = scmp.eq.s32.totalorder %s39, 0
      %s42 = sadd.s32 %s41, 1
      %s43 = scalar_select %p40, %s41, %s42
      %p46 = pneg %p40
      %p47 = scmp.eq.s32.totalorder %s31, 1
      %p48 = por %p46, %p47
      %p49 = scmp.ne.s32.totalorder %s41, %s44
      %p50 = scmp.eq.s32.totalorder %s31, 0
      %p51 = por %p49, %p50
      %p52 = scmp.ne.s32.totalorder %s41, %s44
      %p53 = scmp.eq.s32.totalorder %s36, 1
      %p54 = por %p52, %p53
      %p55 = scmp.ne.s32.totalorder %s44, %s45
      %p56 = scmp.eq.s32.totalorder %s36, 0
      %p57 = por %p55, %p56
      %p58 = scmp.ne.s32.totalorder %s44, %s45
      %p59 = scmp.eq.s32.totalorder %s37, 1
      %p60 = por %p58, %p59
      %p62 = scmp.ne.s32.totalorder %s45, %s61
      %p63 = scmp.eq.s32.totalorder %s37, 0
      %p64 = por %p62, %p63
      %s66 = sadd.s32 %s65, 1
      %p69 = scmp.eq.s32.totalorder %s31, 1
      %p70 = scmp.ne.s32.totalorder %s65, %s67
      %p71 = scmp.eq.s32.totalorder %s31, 0
      %p72 = por %p70, %p71
      %p73 = scmp.ne.s32.totalorder %s65, %s67
      %p74 = scmp.eq.s32.totalorder %s36, 1
      %p75 = por %p73, %p74
      %p76 = scmp.ne.s32.totalorder %s67, %s68
      %p77 = scmp.eq.s32.totalorder %s36, 0
      %p78 = por %p76, %p77
      %p79 = scmp.ne.s32.totalorder %s67, %s68
      %p80 = scmp.eq.s32.totalorder %s37, 1
      %p81 = por %p79, %p80
      %p83 = scmp.ne.s32.totalorder %s68, %s82
      %p84 = scmp.eq.s32.totalorder %s37, 0
      %p85 = por %p83, %p84
      %s87 = sadd.s32 %s86, 1
      %p90 = scmp.eq.s32.totalorder %s31, 1
      %p91 = scmp.ne.s32.totalorder %s86, %s88
      %p92 = scmp.eq.s32.totalorder %s31, 0
      %p93 = por %p91, %p92
      %p94 = scmp.ne.s32.totalorder %s86, %s88
      %p95 = scmp.eq.s32.totalorder %s36, 1
      %p96 = por %p94, %p95
      %p97 = scmp.ne.s32.totalorder %s88, %s89
      %p98 = scmp.eq.s32.totalorder %s36, 0
      %p99 = por %p97, %p98
      %p100 = scmp.ne.s32.totalorder %s88, %s89
      %p101 = scmp.eq.s32.totalorder %s37, 1
      %p102 = por %p100, %p101
      %p104 = scmp.ne.s32.totalorder %s89, %s103
      %p105 = scmp.eq.s32.totalorder %s37, 0
      %p106 = por %p104, %p105
      %s108 = sadd.s32 %s107, 1
      %p111 = scmp.eq.s32.totalorder %s31, 1
      %p112 = scmp.ne.s32.totalorder %s107, %s109
      %p113 = scmp.eq.s32.totalorder %s31, 0
      %p114 = por %p112, %p113
      %p115 = scmp.ne.s32.totalorder %s107, %s109
      %p116 = scmp.eq.s32.totalorder %s36, 1
      %p117 = por %p115, %p116
      %p118 = scmp.ne.s32.totalorder %s109, %s110
      %p119 = scmp.eq.s32.totalorder %s36, 0
      %p120 = por %p118, %p119
      %p121 = scmp.ne.s32.totalorder %s109, %s110
      %p122 = scmp.eq.s32.totalorder %s37, 1
      %p123 = por %p121, %p122
      %p125 = scmp.ne.s32.totalorder %s110, %s124
      %p126 = scmp.eq.s32.totalorder %s37, 0
      %p127 = por %p125, %p126
      %s129 = sadd.s32 %s128, 1
      %p132 = scmp.eq.s32.totalorder %s31, 1
      %p133 = scmp.ne.s32.totalorder %s128, %s130
      %p134 = scmp.eq.s32.totalorder %s31, 0
      %p135 = por %p133, %p134
      %p136 = scmp.ne.s32.totalorder %s128, %s130
      %p137 = scmp.eq.s32.totalorder %s36, 1
      %p138 = por %p136, %p137
      %p139 = scmp.ne.s32.totalorder %s130, %s131
      %p140 = scmp.eq.s32.totalorder %s36, 0
      %p141 = por %p139, %p140
      %p142 = scmp.ne.s32.totalorder %s130, %s131
      %p143 = scmp.eq.s32.totalorder %s37, 1
      %p144 = por %p142, %p143
      %p146 = scmp.ne.s32.totalorder %s131, %s145
      %p147 = scmp.eq.s32.totalorder %s37, 0
      %p148 = por %p146, %p147
      %s150 = sadd.s32 %s149, 1
      %p153 = scmp.eq.s32.totalorder %s31, 1
      %p154 = scmp.ne.s32.totalorder %s149, %s151
      %p155 = scmp.eq.s32.totalorder %s31, 0
      %p156 = por %p154, %p155
      %p157 = scmp.ne.s32.totalorder %s149, %s151
      %p158 = scmp.eq.s32.totalorder %s36, 1
      %p159 = por %p157, %p158
      %p160 = scmp.ne.s32.totalorder %s151, %s152
      %p161 = scmp.eq.s32.totalorder %s36, 0
      %p162 = por %p160, %p161
      %p163 = scmp.ne.s32.totalorder %s151, %s152
      %p164 = scmp.eq.s32.totalorder %s37, 1
      %p165 = por %p163, %p164
      %p167 = scmp.ne.s32.totalorder %s152, %s166
      %p168 = scmp.eq.s32.totalorder %s37, 0
      %p169 = por %p167, %p168
      %s171 = sadd.s32 %s170, 1
      %p174 = scmp.eq.s32.totalorder %s31, 1
      %p175 = scmp.ne.s32.totalorder %s170, %s172
      %p176 = scmp.eq.s32.totalorder %s31, 0
      %p177 = por %p175, %p176
      %p178 = scmp.ne.s32.totalorder %s170, %s172
      %p179 = scmp.eq.s32.totalorder %s36, 1
      %p180 = por %p178, %p179
      %p181 = scmp.ne.s32.totalorder %s172, %s173
      %p182 = scmp.eq.s32.totalorder %s36, 0
      %p183 = por %p181, %p182
      %p184 = scmp.ne.s32.totalorder %s172, %s173
      %p185 = scmp.eq.s32.totalorder %s37, 1
      %p186 = por %p184, %p185
      %p188 = scmp.ne.s32.totalorder %s173, %s187
      %p189 = scmp.eq.s32.totalorder %s37, 0
      %p190 = por %p188, %p189
      %s192 = sadd.s32 %s191, 1
      %p195 = scmp.eq.s32.totalorder %s31, 1
      %p196 = scmp.ne.s32.totalorder %s191, %s193
      %p197 = scmp.eq.s32.totalorder %s31, 0
      %p198 = por %p196, %p197
      %p199 = scmp.ne.s32.totalorder %s191, %s193
      %p200 = scmp.eq.s32.totalorder %s36, 1
      %p201 = por %p199, %p200
      %p202 = scmp.ne.s32.totalorder %s193, %s194
      %p203 = scmp.eq.s32.totalorder %s36, 0
      %p204 = por %p202, %p203
      %p205 = scmp.ne.s32.totalorder %s193, %s194
      %p206 = scmp.eq.s32.totalorder %s37, 1
      %p207 = por %p205, %p206
      %p209 = scmp.ne.s32.totalorder %s194, %s208
      %p210 = scmp.eq.s32.totalorder %s37, 0
      %p211 = por %p209, %p210
      %s213 = sadd.s32 %s212, 1
      %p216 = scmp.eq.s32.totalorder %s31, 1
      %p217 = scmp.ne.s32.totalorder %s212, %s214
      %p218 = scmp.eq.s32.totalorder %s31, 0
      %p219 = por %p217, %p218
      %p220 = scmp.ne.s32.totalorder %s212, %s214
      %p221 = scmp.eq.s32.totalorder %s36, 1
      %p222 = por %p220, %p221
      %p223 = scmp.ne.s32.totalorder %s214, %s215
      %p224 = scmp.eq.s32.totalorder %s36, 0
      %p225 = por %p223, %p224
      %p226 = scmp.ne.s32.totalorder %s214, %s215
      %p227 = scmp.eq.s32.totalorder %s37, 1
      %p228 = por %p226, %p227
      %p230 = scmp.ne.s32.totalorder %s215, %s229
      %p231 = scmp.eq.s32.totalorder %s37, 0
      %p232 = por %p230, %p231
      %s234 = sadd.s32 %s233, 1
      %p237 = scmp.eq.s32.totalorder %s31, 1
      %p238 = scmp.ne.s32.totalorder %s233, %s235
      %p239 = scmp.eq.s32.totalorder %s31, 0
      %p240 = por %p238, %p239
      %p241 = scmp.ne.s32.totalorder %s233, %s235
      %p242 = scmp.eq.s32.totalorder %s36, 1
      %p243 = por %p241, %p242
      %p244 = scmp.ne.s32.totalorder %s235, %s236
      %p245 = scmp.eq.s32.totalorder %s36, 0
      %p246 = por %p244, %p245
      %p247 = scmp.ne.s32.totalorder %s235, %s236
      %p248 = scmp.eq.s32.totalorder %s37, 1
      %p249 = por %p247, %p248
      %p251 = scmp.ne.s32.totalorder %s236, %s250
      %p252 = scmp.eq.s32.totalorder %s37, 0
      %p253 = por %p251, %p252
      %s255 = sadd.s32 %s254, 1
      %p258 = scmp.eq.s32.totalorder %s31, 1
      %p259 = scmp.ne.s32.totalorder %s254, %s256
      %p260 = scmp.eq.s32.totalorder %s31, 0
      %p261 = por %p259, %p260
      %p262 = scmp.ne.s32.totalorder %s254, %s256
      %p263 = scmp.eq.s32.totalorder %s36, 1
      %p264 = por %p262, %p263
      %p265 = scmp.ne.s32.totalorder %s256, %s257
      %p266 = scmp.eq.s32.totalorder %s36, 0
      %p267 = por %p265, %p266
      %p268 = scmp.ne.s32.totalorder %s256, %s257
      %p269 = scmp.eq.s32.totalorder %s37, 1
      %p270 = por %p268, %p269
      %p272 = scmp.ne.s32.totalorder %s257, %s271
      %p273 = scmp.eq.s32.totalorder %s37, 0
      %p274 = por %p272, %p273
      %s276 = sadd.s32 %s275, 1
      %p279 = scmp.eq.s32.totalorder %s31, 1
      %p280 = scmp.ne.s32.totalorder %s275, %s277
      %p281 = scmp.eq.s32.totalorder %s31, 0
      %p282 = por %p280, %p281
      %p283 = scmp.ne.s32.totalorder %s275, %s277
      %p284 = scmp.eq.s32.totalorder %s36, 1
      %p285 = por %p283, %p284
      %p286 = scmp.ne.s32.totalorder %s277, %s278
      %p287 = scmp.eq.s32.totalorder %s36, 0
      %p288 = por %p286, %p287
      %p289 = scmp.ne.s32.totalorder %s277, %s278
      %p290 = scmp.eq.s32.totalorder %s37, 1
      %p291 = por %p289, %p290
      %p293 = scmp.ne.s32.totalorder %s278, %s292
      %p294 = scmp.eq.s32.totalorder %s37, 0
      %p295 = por %p293, %p294
      %s297 = sadd.s32 %s296, 1
      %p300 = scmp.eq.s32.totalorder %s31, 1
      %p301 = scmp.ne.s32.totalorder %s296, %s298
      %p302 = scmp.eq.s32.totalorder %s31, 0
      %p303 = por %p301, %p302
      %p304 = scmp.ne.s32.totalorder %s296, %s298
      %p305 = scmp.eq.s32.totalorder %s36, 1
      %p306 = por %p304, %p305
      %p307 = scmp.ne.s32.totalorder %s298, %s299
      %p308 = scmp.eq.s32.totalorder %s36, 0
      %p309 = por %p307, %p308
      %p310 = scmp.ne.s32.totalorder %s298, %s299
      %p311 = scmp.eq.s32.totalorder %s37, 1
      %p312 = por %p310, %p311
      %p314 = scmp.ne.s32.totalorder %s299, %s313
      %p315 = scmp.eq.s32.totalorder %s37, 0
      %p316 = por %p314, %p315
      %s318 = sadd.s32 %s317, 1
      %p321 = scmp.eq.s32.totalorder %s31, 1
      %p322 = scmp.ne.s32.totalorder %s317, %s319
      %p323 = scmp.eq.s32.totalorder %s31, 0
      %p324 = por %p322, %p323
      %p325 = scmp.ne.s32.totalorder %s317, %s319
      %p326 = scmp.eq.s32.totalorder %s36, 1
      %p327 = por %p325, %p326
      %p328 = scmp.ne.s32.totalorder %s319, %s320
      %p329 = scmp.eq.s32.totalorder %s36, 0
      %p330 = por %p328, %p329
      %p331 = scmp.ne.s32.totalorder %s319, %s320
      %p332 = scmp.eq.s32.totalorder %s37, 1
      %p333 = por %p331, %p332
      %p335 = scmp.ne.s32.totalorder %s320, %s334
      %p336 = scmp.eq.s32.totalorder %s37, 0
      %p337 = por %p335, %p336
      %s339 = sadd.s32 %s338, 1
      %p342 = scmp.eq.s32.totalorder %s31, 1
      %p343 = scmp.ne.s32.totalorder %s338, %s340
      %p344 = scmp.eq.s32.totalorder %s31, 0
      %p345 = por %p343, %p344
      %p346 = scmp.ne.s32.totalorder %s338, %s340
      %p347 = scmp.eq.s32.totalorder %s36, 1
      %p348 = por %p346, %p347
      %p349 = scmp.ne.s32.totalorder %s340, %s341
      %p350 = scmp.eq.s32.totalorder %s36, 0
      %p351 = por %p349, %p350
      %p352 = scmp.ne.s32.totalorder %s340, %s341
      %p353 = scmp.eq.s32.totalorder %s37, 1
      %p354 = por %p352, %p353
      %p356 = scmp.ne.s32.totalorder %s341, %s355
      %p357 = scmp.eq.s32.totalorder %s37, 0
      %p358 = por %p356, %p357
      %s360 = sadd.s32 %s359, 1
      %p363 = scmp.eq.s32.totalorder %s31, 1
      %p364 = scmp.ne.s32.totalorder %s359, %s361
      %p365 = scmp.eq.s32.totalorder %s31, 0
      %p366 = por %p364, %p365
      %p367 = scmp.ne.s32.totalorder %s359, %s361
      %p368 = scmp.eq.s32.totalorder %s36, 1
      %p369 = por %p367, %p368
      %p370 = scmp.ne.s32.totalorder %s361, %s362
      %p371 = scmp.eq.s32.totalorder %s36, 0
      %p372 = por %p370, %p371
      %p373 = scmp.ne.s32.totalorder %s361, %s362
      %p374 = scmp.eq.s32.totalorder %s37, 1
      %p375 = por %p373, %p374
      %p377 = scmp.ne.s32.totalorder %s362, %s376
      %p378 = scmp.eq.s32.totalorder %s37, 0
      %p379 = por %p377, %p378
      %s381 = sadd.s32 %s380, 1
      %p384 = scmp.eq.s32.totalorder %s31, 1
      %p385 = scmp.ne.s32.totalorder %s380, %s382
      %p386 = scmp.eq.s32.totalorder %s31, 0
      %p387 = por %p385, %p386
      %p388 = scmp.ne.s32.totalorder %s380, %s382
      %p389 = scmp.eq.s32.totalorder %s36, 1
      %p390 = por %p388, %p389
      %p391 = scmp.ne.s32.totalorder %s382, %s383
      %p392 = scmp.eq.s32.totalorder %s36, 0
      %p393 = por %p391, %p392
      %p394 = scmp.ne.s32.totalorder %s382, %s383
      %p395 = scmp.eq.s32.totalorder %s37, 1
      %p396 = por %p394, %p395
      %p398 = scmp.ne.s32.totalorder %s383, %s397
      %p399 = scmp.eq.s32.totalorder %s37, 0
      %p400 = por %p398, %p399
      %s402 = sadd.s32 %s401, 1
      %p405 = scmp.eq.s32.totalorder %s31, 1
      %p406 = scmp.ne.s32.totalorder %s401, %s403
      %p407 = scmp.eq.s32.totalorder %s31, 0
      %p408 = por %p406, %p407
      %p409 = scmp.ne.s32.totalorder %s401, %s403
      %p410 = scmp.eq.s32.totalorder %s36, 1
      %p411 = por %p409, %p410
      %p412 = scmp.ne.s32.totalorder %s403, %s404
      %p413 = scmp.eq.s32.totalorder %s36, 0
      %p414 = por %p412, %p413
      %p415 = scmp.ne.s32.totalorder %s403, %s404
      %p416 = scmp.eq.s32.totalorder %s37, 1
      %p417 = por %p415, %p416
      %p419 = scmp.ne.s32.totalorder %s404, %s418
      %p420 = scmp.eq.s32.totalorder %s37, 0
      %p421 = por %p419, %p420
      %s423 = sadd.s32 %s422, 1
      %p426 = scmp.eq.s32.totalorder %s31, 1
      %p427 = scmp.ne.s32.totalorder %s422, %s424
      %p428 = scmp.eq.s32.totalorder %s31, 0
      %p429 = por %p427, %p428
      %p430 = scmp.ne.s32.totalorder %s422, %s424
      %p431 = scmp.eq.s32.totalorder %s36, 1
      %p432 = por %p430, %p431
      %p433 = scmp.ne.s32.totalorder %s424, %s425
      %p434 = scmp.eq.s32.totalorder %s36, 0
      %p435 = por %p433, %p434
      %p436 = scmp.ne.s32.totalorder %s424, %s425
      %p437 = scmp.eq.s32.totalorder %s37, 1
      %p438 = por %p436, %p437
      %p440 = scmp.ne.s32.totalorder %s425, %s439
      %p441 = scmp.eq.s32.totalorder %s37, 0
      %p442 = por %p440, %p441
      %s443 = ssub.s32 %s31, %s38
      %p444 = scmp.eq.s32.totalorder %s443, 0
      %s446 = sadd.s32 %s445, 1
      %s447 = scalar_select %p444, %s445, %s446
      %p450 = pneg %p444
      %p451 = scmp.eq.s32.totalorder %s31, 1
      %p452 = por %p450, %p451
      %p453 = scmp.ne.s32.totalorder %s445, %s448
      %p454 = scmp.eq.s32.totalorder %s31, 0
      %p455 = por %p453, %p454
      %p456 = scmp.ne.s32.totalorder %s445, %s448
      %p457 = scmp.eq.s32.totalorder %s36, 1
      %p458 = por %p456, %p457
      %p459 = scmp.ne.s32.totalorder %s448, %s449
      %p460 = scmp.eq.s32.totalorder %s36, 0
      %p461 = por %p459, %p460
      %p462 = scmp.ne.s32.totalorder %s448, %s449
      %p463 = scmp.eq.s32.totalorder %s37, 1
      %p464 = por %p462, %p463
      %p466 = scmp.ne.s32.totalorder %s449, %s465
      %p467 = scmp.eq.s32.totalorder %s37, 0
      %p468 = por %p466, %p467
      %p469 = scmp.le.s32.totalorder 1, %s31
      %p470 = scmp.lt.s32.totalorder %s31, 3
      %p471 = pnand %p469, %p470
      %p472 = pneg %p471
      // Predicated region
      $region9: #{tpu_custom_call.1} parent=5 // pred_check
        _
      $region10: #{tpu_custom_call.1} parent=5 // pred_check_branch
        %474 = sbr.rel (%p471) target = $region12
      $region11: #{tpu_custom_call.1} parent=5 // pred_region
        %s475 = ssub.s32 %s31, 1
        // Predicated region
        $region13: #{tpu_custom_call.1} parent=11 // pred_check
          %p476 = pneg %p78
        $region14: #{tpu_custom_call.1} parent=11 // pred_check_branch
          %478 = sbr.rel (%p476) target = $region16
        $region15: #{tpu_custom_call.1} parent=11 // pred_region
          %480 = vsyncadd [#allocation3], 0
          %s482 = sshll.u32 %s1, 4
          %s483 = int_to_ptr.hbm [resolvable:$true] %s482
          %s484 = sshll.u32 [#allocation2], 4
          %s485 = int_to_ptr.vmem [resolvable:$true] %s484
          %487 = dma.hbm_to_vmem [thread:$0]  %s483, 16, %s485, [#allocation3]
        $region16: #{tpu_custom_call.1} parent=11 // pred_fallthru
          _
        // Predicated region
        $region17: #{tpu_custom_call.1} parent=11 // pred_check
          %p488 = pneg %p99
        $region18: #{tpu_custom_call.1} parent=11 // pred_check_branch
          %490 = sbr.rel (%p488) target = $region20
        $region19: #{tpu_custom_call.1} parent=11 // pred_region
          _
        $region20: #{tpu_custom_call.1} parent=11 // pred_fallthru
          _
        // Predicated region
        $region21: #{tpu_custom_call.1} parent=11 // pred_check
          %p491 = pneg %p120
        $region22: #{tpu_custom_call.1} parent=11 // pred_check_branch
          %493 = sbr.rel (%p491) target = $region24
        $region23: #{tpu_custom_call.1} parent=11 // pred_region
          _
        $region24: #{tpu_custom_call.1} parent=11 // pred_fallthru
          _
        // Predicated region
        $region25: #{tpu_custom_call.1} parent=11 // pred_check
          %p494 = pneg %p141
        $region26: #{tpu_custom_call.1} parent=11 // pred_check_branch
          %496 = sbr.rel (%p494) target = $region28
        $region27: #{tpu_custom_call.1} parent=11 // pred_region
          _
        $region28: #{tpu_custom_call.1} parent=11 // pred_fallthru
          _
        // Predicated region
        $region29: #{tpu_custom_call.1} parent=11 // pred_check
          %p497 = pneg %p162
        $region30: #{tpu_custom_call.1} parent=11 // pred_check_branch
          %499 = sbr.rel (%p497) target = $region32
        $region31: #{tpu_custom_call.1} parent=11 // pred_region
          _
        $region32: #{tpu_custom_call.1} parent=11 // pred_fallthru
          _
        // Predicated region
        $region33: #{tpu_custom_call.1} parent=11 // pred_check
          %p500 = pneg %p183
        $region34: #{tpu_custom_call.1} parent=11 // pred_check_branch
          %502 = sbr.rel (%p500) target = $region36
        $region35: #{tpu_custom_call.1} parent=11 // pred_region
          _
        $region36: #{tpu_custom_call.1} parent=11 // pred_fallthru
          _
        // Predicated region
        $region37: #{tpu_custom_call.1} parent=11 // pred_check
          %p503 = pneg %p204
        $region38: #{tpu_custom_call.1} parent=11 // pred_check_branch
          %505 = sbr.rel (%p503) target = $region40
        $region39: #{tpu_custom_call.1} parent=11 // pred_region
          %507 = vsyncadd [#allocation6], 0
          %s508 = sshll.u32 %s7, 4
          %s509 = int_to_ptr.hbm [resolvable:$true] %s508
          %s510 = sshll.u32 [#allocation5], 4
          %s511 = int_to_ptr.vmem [resolvable:$true] %s510
          %516 = dma.hbm_to_vmem [thread:$0]  %s509, 256, %s511, [#allocation6], 64, 64, 4
        $region40: #{tpu_custom_call.1} parent=11 // pred_fallthru
          _
        // Predicated region
        $region41: #{tpu_custom_call.1} parent=11 // pred_check
          %p517 = pneg %p225
        $region42: #{tpu_custom_call.1} parent=11 // pred_check_branch
          %519 = sbr.rel (%p517) target = $region44
        $region43: #{tpu_custom_call.1} parent=11 // pred_region
          _
        $region44: #{tpu_custom_call.1} parent=11 // pred_fallthru
          _
        // Predicated region
        $region45: #{tpu_custom_call.1} parent=11 // pred_check
          %p520 = pneg %p246
        $region46: #{tpu_custom_call.1} parent=11 // pred_check_branch
          %522 = sbr.rel (%p520) target = $region48
        $region47: #{tpu_custom_call.1} parent=11 // pred_region
          %524 = vsyncadd [#allocation6], 0
          %s525 = sshll.u32 %s9, 4
          %s526 = int_to_ptr.hbm [resolvable:$true] %s525
          %s527 = sshll.u32 [#allocation7], 4
          %s528 = int_to_ptr.vmem [resolvable:$true] %s527
          %533 = dma.hbm_to_vmem [thread:$0]  %s526, 256, %s528, [#allocation6], 64, 64, 4
        $region48: #{tpu_custom_call.1} parent=11 // pred_fallthru
          _
        // Predicated region
        $region49: #{tpu_custom_call.1} parent=11 // pred_check
          %p534 = pneg %p267
        $region50: #{tpu_custom_call.1} parent=11 // pred_check_branch
          %536 = sbr.rel (%p534) target = $region52
        $region51: #{tpu_custom_call.1} parent=11 // pred_region
          _
        $region52: #{tpu_custom_call.1} parent=11 // pred_fallthru
          _
        // Predicated region
        $region53: #{tpu_custom_call.1} parent=11 // pred_check
          %p537 = pneg %p288
        $region54: #{tpu_custom_call.1} parent=11 // pred_check_branch
          %539 = sbr.rel (%p537) target = $region56
        $region55: #{tpu_custom_call.1} parent=11 // pred_region
          _
        $region56: #{tpu_custom_call.1} parent=11 // pred_fallthru
          _
        // Predicated region
        $region57: #{tpu_custom_call.1} parent=11 // pred_check
          %p540 = pneg %p309
        $region58: #{tpu_custom_call.1} parent=11 // pred_check_branch
          %542 = sbr.rel (%p540) target = $region60
        $region59: #{tpu_custom_call.1} parent=11 // pred_region
          _
        $region60: #{tpu_custom_call.1} parent=11 // pred_fallthru
          _
        // Predicated region
        $region61: #{tpu_custom_call.1} parent=11 // pred_check
          %p543 = pneg %p330
        $region62: #{tpu_custom_call.1} parent=11 // pred_check_branch
          %545 = sbr.rel (%p543) target = $region64
        $region63: #{tpu_custom_call.1} parent=11 // pred_region
          %547 = vsyncadd [#allocation9], 0
          %s548 = sshll.u32 %s13, 4
          %s549 = int_to_ptr.hbm [resolvable:$true] %s548
          %s550 = sshll.u32 [#allocation8], 4
          %s551 = int_to_ptr.vmem [resolvable:$true] %s550
          %556 = dma.hbm_to_vmem [thread:$0]  %s549, 256, %s551, [#allocation9], 64, 64, 4
        $region64: #{tpu_custom_call.1} parent=11 // pred_fallthru
          _
        // Predicated region
        $region65: #{tpu_custom_call.1} parent=11 // pred_check
          %p557 = pneg %p351
        $region66: #{tpu_custom_call.1} parent=11 // pred_check_branch
          %559 = sbr.rel (%p557) target = $region68
        $region67: #{tpu_custom_call.1} parent=11 // pred_region
          _
        $region68: #{tpu_custom_call.1} parent=11 // pred_fallthru
          _
        // Predicated region
        $region69: #{tpu_custom_call.1} parent=11 // pred_check
          %p560 = pneg %p372
        $region70: #{tpu_custom_call.1} parent=11 // pred_check_branch
          %562 = sbr.rel (%p560) target = $region72
        $region71: #{tpu_custom_call.1} parent=11 // pred_region
          _
        $region72: #{tpu_custom_call.1} parent=11 // pred_fallthru
          _
        // Predicated region
        $region73: #{tpu_custom_call.1} parent=11 // pred_check
          %p563 = pneg %p393
        $region74: #{tpu_custom_call.1} parent=11 // pred_check_branch
          %565 = sbr.rel (%p563) target = $region76
        $region75: #{tpu_custom_call.1} parent=11 // pred_region
          _
        $region76: #{tpu_custom_call.1} parent=11 // pred_fallthru
          _
        // Predicated region
        $region77: #{tpu_custom_call.1} parent=11 // pred_check
          %p566 = pneg %p414
        $region78: #{tpu_custom_call.1} parent=11 // pred_check_branch
          %568 = sbr.rel (%p566) target = $region80
        $region79: #{tpu_custom_call.1} parent=11 // pred_region
          _
        $region80: #{tpu_custom_call.1} parent=11 // pred_fallthru
          _
        // Predicated region
        $region81: #{tpu_custom_call.1} parent=11 // pred_check
          %p569 = pneg %p435
        $region82: #{tpu_custom_call.1} parent=11 // pred_check_branch
          %571 = sbr.rel (%p569) target = $region84
        $region83: #{tpu_custom_call.1} parent=11 // pred_region
          _
        $region84: #{tpu_custom_call.1} parent=11 // pred_fallthru
          _
      $region12: #{tpu_custom_call.1} parent=5 // pred_fallthru
        _
      %p572 = scmp.lt.s32.totalorder %s31, 2
      // Predicated region
      $region85: #{tpu_custom_call.1} parent=5 // pred_check
        %p573 = pneg %p572
      $region86: #{tpu_custom_call.1} parent=5 // pred_check_branch
        %575 = sbr.rel (%p573) target = $region88
      $region87: #{tpu_custom_call.1} parent=5 // pred_region
        // Predicated region
        $region89: #{tpu_custom_call.1} parent=87 // pred_check
          %p576 = pneg %p51
        $region90: #{tpu_custom_call.1} parent=87 // pred_check_branch
          %578 = sbr.rel (%p576) target = $region92
        $region91: #{tpu_custom_call.1} parent=87 // pred_region
          %p579 = scmp.lt.s32.totalorder %s31, 1
          %s580 = scalar_select %p579, %s31, 1
          %s581 = smul.addr %s580, 8
          %s582 = scalar_lea.vmem %s0, %s581
        $region92: #{tpu_custom_call.1} parent=87 // pred_fallthru
          _
      $region88: #{tpu_custom_call.1} parent=5 // pred_fallthru
        _
      %p583 = scmp.le.s32.totalorder 1, %s31
      %p584 = scmp.lt.s32.totalorder %s31, 3
      %p585 = pnand %p583, %p584
      %p586 = pneg %p585
      // Predicated region
      $region93: #{tpu_custom_call.1} parent=5 // pred_check
        _
      $region94: #{tpu_custom_call.1} parent=5 // pred_check_branch
        %588 = sbr.rel (%p585) target = $region96
      $region95: #{tpu_custom_call.1} parent=5 // pred_region
        %s589 = ssub.s32 %s31, 1
        // Predicated region
        $region97: #{tpu_custom_call.1} parent=95 // pred_check
          %p590 = pneg %p78
        $region98: #{tpu_custom_call.1} parent=95 // pred_check_branch
          %592 = sbr.rel (%p590) target = $region100
        $region99: #{tpu_custom_call.1} parent=95 // pred_region
          %594 = dma.done [#allocation3], 16
        $region100: #{tpu_custom_call.1} parent=95 // pred_fallthru
          _
        // Predicated region
        $region101: #{tpu_custom_call.1} parent=95 // pred_check
          %p595 = pneg %p204
        $region102: #{tpu_custom_call.1} parent=95 // pred_check_branch
          %597 = sbr.rel (%p595) target = $region104
        $region103: #{tpu_custom_call.1} parent=95 // pred_region
          %599 = dma.done [#allocation6], 256
        $region104: #{tpu_custom_call.1} parent=95 // pred_fallthru
          _
        // Predicated region
        $region105: #{tpu_custom_call.1} parent=95 // pred_check
          %p600 = pneg %p246
        $region106: #{tpu_custom_call.1} parent=95 // pred_check_branch
          %602 = sbr.rel (%p600) target = $region108
        $region107: #{tpu_custom_call.1} parent=95 // pred_region
          %604 = dma.done [#allocation6], 256
        $region108: #{tpu_custom_call.1} parent=95 // pred_fallthru
          _
        // Predicated region
        $region109: #{tpu_custom_call.1} parent=95 // pred_check
          %p605 = pneg %p330
        $region110: #{tpu_custom_call.1} parent=95 // pred_check_branch
          %607 = sbr.rel (%p605) target = $region112
        $region111: #{tpu_custom_call.1} parent=95 // pred_region
          %609 = dma.done [#allocation9], 256
        $region112: #{tpu_custom_call.1} parent=95 // pred_fallthru
          _
        %p610 = scmp.lt.s32.totalorder %s36, 1
        %s611 = scalar_select %p610, %s36, 1
        %s612 = smul.addr %s611, 8
        %s613 = scalar_lea.vmem %s0, %s612
        %p614 = pneg %p57
        %p615 = pneg %p54
        %p616 = pneg %p78
        %p617 = pneg %p75
        %p618 = pneg %p99
        %p619 = pneg %p96
        %p620 = pneg %p120
        %p621 = pneg %p117
        %p622 = pneg %p141
        %p623 = pneg %p138
        %p624 = pneg %p162
        %p625 = pneg %p159
        %p626 = pneg %p183
        %p627 = pneg %p180
        %p628 = pneg %p204
        %p629 = pneg %p201
        %p630 = pneg %p225
        %p631 = pneg %p222
        %p632 = pneg %p246
        %p633 = pneg %p243
        %p634 = pneg %p267
        %p635 = pneg %p264
        %p636 = pneg %p288
        %p637 = pneg %p285
        %p638 = pneg %p309
        %p639 = pneg %p306
        %p640 = pneg %p330
        %p641 = pneg %p327
        %p642 = pneg %p351
        %p643 = pneg %p348
        %p644 = pneg %p372
        %p645 = pneg %p369
        %p646 = pneg %p393
        %p647 = pneg %p390
        %p648 = pneg %p414
        %p649 = pneg %p411
        %p650 = pneg %p435
        %p651 = pneg %p432
        %p652 = pneg %p461
        %p653 = pneg %p458
        %s654 = sand.u32 %s448, 1
        %s655 = scalar_lea.sflag [#allocation4], %s654
        %s656 = sand.u32 %s448, 1
        %s657 = smul.addr %s656, 8
        %s658 = scalar_lea.vmem [#allocation10], %s657
        %p659 = scmp.lt.s32.totalorder %s36, 1
        %s660 = scalar_select %p659, %s36, 1
        %s661 = smul.addr %s660, 8
        %s662 = scalar_lea.vmem %s0, %s661
        %v664 = vld [vmem:[%s662] sm:$0xff]
        %v665 = vld [vmem:[#allocation2] sm:$0x1]
        %v666 = vld [vmem:[%s2] sm:$0x1]
        %vm667 = vcmask 261120
        %v668 = vsel %vm667, %v664, 0.0
        %669 = vadd.xlane.f32.xlu0 %v668
        %v670 = vpop.xlane.xlu0 %669
        %v671 = vrcp.pop 32.0
        %v672 = vmul.f32 32.0, %v671
        %v673 = vsub.f32 1.0, %v672
        %v674 = vmul.f32 %v671, %v673
        %v675 = vadd.f32 %v671, %v674
        %vm676 = vweird.f32 %v671
        %v677 = vsel %vm676, %v671, %v675
        %v678 = vmul.f32 %v670, %v677
        %v679 = vsub.f32 %v664, %v678
        %v680 = vmul.f32 %v679, %v679
        %v681 = vsel %vm667, %v680, 0.0
        %682 = vadd.xlane.f32.xlu0 %v681
        %v683 = vpop.xlane.xlu0 %682
        %v684 = vmul.f32 %v683, %v677
        %v685 = vadd.f32 %v684, 1e-06
        %v686 = vrsqrt.pop %v685
        %v687 = vmul.f32 %v686, %v685
        %v688 = vmul.f32 %v687, %v686
        %v689 = vmul.f32 0.5, %v688
        %v690 = vsub.f32 1.5, %v689
        %v691 = vmul.f32 %v686, %v690
        %vm692 = vweird.f32 %v685
        %vm693 = vweird.f32 %v686
        %vm694 = vmor %vm692, %vm693
        %v695 = vsel %vm694, %v686, %v691
        %v696 = vmul.f32 %v679, %v695
        %v698 = vperm.slane %v665, 0
        %v700 = vmul.f32 %v696, %v698
        %v702 = vperm.slane %v666, 0
        %v704 = vadd.f32 %v700, %v702
        %v705 = vpack.c.bf16 %v704, %v704
        %v706 = vld [vmem:[%s3] sm:$0xf]
        %v707 = vld [vmem:[%s3 + $0x4] sm:$0xf]
        %v708 = vld [vmem:[%s3 + $0x8] sm:$0xf]
        %v709 = vld [vmem:[%s3 + $0xc] sm:$0xf]
        %v710 = vld [vmem:[%s4] sm:$0x1]
        %v712 = vperm.slane %v710, 0
        %v718 = vunpack.c.l.b16 %v706
        %v719 = vunpack.c.l.b16 %v707
        %v720 = vunpack.c.l.b16 %v708
        %v721 = vunpack.c.l.b16 %v709
        %v722 = vpack.c.b16 %v719, %v718
        %v723 = vpack.c.b16 %v721, %v720
        %v727 = vsel %vm667, %v705, 0
        %729 = vmatpush.bf16.msra.mxu0 0
        %730 = vmatpush.bf16.msra.mxu0 0
        %731 = vmatpush.bf16.msra.mxu0 0
        %732 = vmatpush.bf16.msra.mxu0 0
        %733 = vmatpush.bf16.msra.mxu0 0
        %734 = vmatpush.bf16.msra.mxu0 0
        %735 = vmatpush.bf16.msra.mxu0 %v723
        %736 = vmatpush.bf16.msra.mxu0 %v722
        %737 = vmatmul.bf16.gmra.mxu0 %v727
        %v738 = vpop.f32.mrf.mxu0
        %v739 = vadd.f32 %v712, %v738
        %v740 = vpop.f32.mrf.mxu0
        %741 = vdwg.mxu0
        %v742 = vld [vmem:[%s5] sm:$0xf]
        %v743 = vld [vmem:[%s5 + $0x4] sm:$0xf]
        %v744 = vld [vmem:[%s5 + $0x8] sm:$0xf]
        %v745 = vld [vmem:[%s5 + $0xc] sm:$0xf]
        %v746 = vld [vmem:[%s6] sm:$0x1]
        %v748 = vperm.slane %v746, 0
        %v754 = vunpack.c.l.b16 %v742
        %v755 = vunpack.c.l.b16 %v743
        %v756 = vunpack.c.l.b16 %v744
        %v757 = vunpack.c.l.b16 %v745
        %v758 = vpack.c.b16 %v755, %v754
        %v759 = vpack.c.b16 %v757, %v756
        %762 = vmatpush.bf16.msra.mxu0 0
        %763 = vmatpush.bf16.msra.mxu0 0
        %764 = vmatpush.bf16.msra.mxu0 0
        %765 = vmatpush.bf16.msra.mxu0 0
        %766 = vmatpush.bf16.msra.mxu0 0
        %767 = vmatpush.bf16.msra.mxu0 0
        %768 = vmatpush.bf16.msra.mxu0 %v759
        %769 = vmatpush.bf16.msra.mxu0 %v758
        %770 = vmatmul.bf16.gmra.mxu0 %v727
        %v771 = vpop.f32.mrf.mxu0
        %v772 = vadd.f32 %v748, %v771
        %v773 = vpop.f32.mrf.mxu0
        %774 = vdwg.mxu0
        %v775 = vld [vmem:[#allocation5] sm:$0xf]
        %v776 = vld [vmem:[#allocation5 + $0x4] sm:$0xf]
        %v777 = vld [vmem:[#allocation5 + $0x8] sm:$0xf]
        %v778 = vld [vmem:[#allocation5 + $0xc] sm:$0xf]
        %v779 = vld [vmem:[%s8] sm:$0x1]
        %v781 = vperm.slane %v779, 0
        %v787 = vunpack.c.l.b16 %v775
        %v788 = vunpack.c.l.b16 %v776
        %v789 = vunpack.c.l.b16 %v777
        %v790 = vunpack.c.l.b16 %v778
        %v791 = vpack.c.b16 %v788, %v787
        %v792 = vpack.c.b16 %v790, %v789
        %795 = vmatpush.bf16.msra.mxu0 0
        %796 = vmatpush.bf16.msra.mxu0 0
        %797 = vmatpush.bf16.msra.mxu0 0
        %798 = vmatpush.bf16.msra.mxu0 0
        %799 = vmatpush.bf16.msra.mxu0 0
        %800 = vmatpush.bf16.msra.mxu0 0
        %801 = vmatpush.bf16.msra.mxu0 %v792
        %802 = vmatpush.bf16.msra.mxu0 %v791
        %803 = vmatmul.bf16.gmra.mxu0 %v727
        %v804 = vpop.f32.mrf.mxu0
        %v805 = vadd.f32 %v781, %v804
        %v806 = vpop.f32.mrf.mxu0
        %807 = vdwg.mxu0
        %v808 = vpack.c.bf16 %v739, %v739
        %810 = vrot.lane.b32.xlu0 %v808, 120
        %v811 = vpop.permute.xlu0 %810
        %812 = vrot.lane.b32.xlu0 %v808, 112
        %v813 = vpop.permute.xlu0 %812
        %814 = vrot.lane.b32.xlu0 %v808, 104
        %v815 = vpop.permute.xlu0 %814
        %v816 = vpack.c.bf16 %v772, %v772
        %818 = vrot.lane.b32.xlu0 %v816, 120
        %v819 = vpop.permute.xlu0 %818
        %820 = vrot.lane.b32.xlu0 %v816, 112
        %v821 = vpop.permute.xlu0 %820
        %822 = vrot.lane.b32.xlu0 %v816, 104
        %v823 = vpop.permute.xlu0 %822
        %v824 = vpack.c.bf16 %v805, %v805
        %826 = vrot.lane.b32.xlu0 %v824, 120
        %v827 = vpop.permute.xlu0 %826
        %828 = vrot.lane.b32.xlu0 %v824, 112
        %v829 = vpop.permute.xlu0 %828
        %830 = vrot.lane.b32.xlu0 %v824, 104
        %v831 = vpop.permute.xlu0 %830
        %vm832 = vcmask 64512
        %v834 = vsel %vm832, %v808, 0
        %v837 = vsel %vm832, %v816, 0
        %839 = vmatpush.bf16.xpose.msra.mxu0 0
        %840 = vmatpush.bf16.xpose.msra.mxu0 0
        %841 = vmatpush.bf16.xpose.msra.mxu0 0
        %842 = vmatpush.bf16.xpose.msra.mxu0 0
        %843 = vmatpush.bf16.xpose.msra.mxu0 0
        %844 = vmatpush.bf16.xpose.msra.mxu0 0
        %845 = vmatpush.bf16.xpose.msra.mxu0 0
        %846 = vmatpush.bf16.xpose.msra.mxu0 %v837
        %847 = vmatmul.bf16.gmra.mxu0 %v834
        %v848 = vpop.f32.mrf.mxu0
        %v849 = vadd.f32 0.0, %v848
        %v850 = vpop.f32.mrf.mxu0
        %851 = vdwg.mxu0
        %v853 = vsel %vm832, %v811, 0
        %v856 = vsel %vm832, %v819, 0
        %858 = vmatpush.bf16.xpose.msra.mxu0 0
        %859 = vmatpush.bf16.xpose.msra.mxu0 0
        %860 = vmatpush.bf16.xpose.msra.mxu0 0
        %861 = vmatpush.bf16.xpose.msra.mxu0 0
        %862 = vmatpush.bf16.xpose.msra.mxu0 0
        %863 = vmatpush.bf16.xpose.msra.mxu0 0
        %864 = vmatpush.bf16.xpose.msra.mxu0 0
        %865 = vmatpush.bf16.xpose.msra.mxu0 %v856
        %866 = vmatmul.bf16.gmra.mxu0 %v853
        %v867 = vpop.f32.mrf.mxu0
        %v868 = vadd.f32 0.0, %v867
        %v869 = vpop.f32.mrf.mxu0
        %870 = vdwg.mxu0
        %v872 = vsel %vm832, %v813, 0
        %v875 = vsel %vm832, %v821, 0
        %877 = vmatpush.bf16.xpose.msra.mxu0 0
        %878 = vmatpush.bf16.xpose.msra.mxu0 0
        %879 = vmatpush.bf16.xpose.msra.mxu0 0
        %880 = vmatpush.bf16.xpose.msra.mxu0 0
        %881 = vmatpush.bf16.xpose.msra.mxu0 0
        %882 = vmatpush.bf16.xpose.msra.mxu0 0
        %883 = vmatpush.bf16.xpose.msra.mxu0 0
        %884 = vmatpush.bf16.xpose.msra.mxu0 %v875
        %885 = vmatmul.bf16.gmra.mxu0 %v872
        %v886 = vpop.f32.mrf.mxu0
        %v887 = vadd.f32 0.0, %v886
        %v888 = vpop.f32.mrf.mxu0
        %889 = vdwg.mxu0
        %v891 = vsel %vm832, %v815, 0
        %v894 = vsel %vm832, %v823, 0
        %896 = vmatpush.bf16.xpose.msra.mxu0 0
        %897 = vmatpush.bf16.xpose.msra.mxu0 0
        %898 = vmatpush.bf16.xpose.msra.mxu0 0
        %899 = vmatpush.bf16.xpose.msra.mxu0 0
        %900 = vmatpush.bf16.xpose.msra.mxu0 0
        %901 = vmatpush.bf16.xpose.msra.mxu0 0
        %902 = vmatpush.bf16.xpose.msra.mxu0 0
        %903 = vmatpush.bf16.xpose.msra.mxu0 %v894
        %904 = vmatmul.bf16.gmra.mxu0 %v891
        %v905 = vpop.f32.mrf.mxu0
        %v906 = vadd.f32 0.0, %v905
        %v907 = vpop.f32.mrf.mxu0
        %908 = vdwg.mxu0
        %v909 = vmul.f32 %v849, 0.35355338
        %v910 = vmul.f32 %v868, 0.35355338
        %v911 = vmul.f32 %v887, 0.35355338
        %v912 = vmul.f32 %v906, 0.35355338
        %v913 = vsel %vm832, %v909, -inf
        %914 = vmax.xlane.f32.xlu0 %v913
        %v915 = vpop.xlane.xlu0 %914
        %v916 = vsel %vm832, %v910, -inf
        %917 = vmax.xlane.f32.xlu0 %v916
        %v918 = vpop.xlane.xlu0 %917
        %v919 = vsel %vm832, %v911, -inf
        %920 = vmax.xlane.f32.xlu0 %v919
        %v921 = vpop.xlane.xlu0 %920
        %v922 = vsel %vm832, %v912, -inf
        %923 = vmax.xlane.f32.xlu0 %v922
        %v924 = vpop.xlane.xlu0 %923
        %v925 = vsub.f32 %v909, %v915
        %v926 = vsub.f32 %v910, %v918
        %v927 = vsub.f32 %v911, %v921
        %v928 = vsub.f32 %v912, %v924
        %v929 = vmul.f32 %v925, 1.442695
        %v930 = vpow.pop %v929
        %v931 = vmul.f32 %v926, 1.442695
        %v932 = vpow.pop %v931
        %v933 = vmul.f32 %v927, 1.442695
        %v934 = vpow.pop %v933
        %v935 = vmul.f32 %v928, 1.442695
        %v936 = vpow.pop %v935
        %v937 = vsel %vm832, %v930, 0.0
        %938 = vadd.xlane.f32.xlu0 %v937
        %v939 = vpop.xlane.xlu0 %938
        %v940 = vsel %vm832, %v932, 0.0
        %941 = vadd.xlane.f32.xlu0 %v940
        %v942 = vpop.xlane.xlu0 %941
        %v943 = vsel %vm832, %v934, 0.0
        %944 = vadd.xlane.f32.xlu0 %v943
        %v945 = vpop.xlane.xlu0 %944
        %v946 = vsel %vm832, %v936, 0.0
        %947 = vadd.xlane.f32.xlu0 %v946
        %v948 = vpop.xlane.xlu0 %947
        %v949 = vrcp.pop %v939
        %v950 = vrcp.pop %v942
        %v951 = vrcp.pop %v945
        %v952 = vrcp.pop %v948
        %v953 = vmul.f32 %v930, %v949
        %v954 = vmul.f32 %v932, %v950
        %v955 = vmul.f32 %v934, %v951
        %v956 = vmul.f32 %v936, %v952
        %v957 = vpack.c.bf16 %v953, %v953
        %v958 = vpack.c.bf16 %v954, %v954
        %v959 = vpack.c.bf16 %v955, %v955
        %v960 = vpack.c.bf16 %v956, %v956
        %v962 = vsel %vm832, %v957, 0
        %vm964 = vcmask 1043456
        %v966 = vsel %vm964, %v824, 0
        %968 = vmatpush.bf16.msra.mxu0 0
        %969 = vmatpush.bf16.msra.mxu0 0
        %970 = vmatpush.bf16.msra.mxu0 0
        %971 = vmatpush.bf16.msra.mxu0 0
        %972 = vmatpush.bf16.msra.mxu0 0
        %973 = vmatpush.bf16.msra.mxu0 0
        %974 = vmatpush.bf16.msra.mxu0 0
        %975 = vmatpush.bf16.msra.mxu0 %v966
        %976 = vmatmul.bf16.gmra.mxu0 %v962
        %v977 = vpop.f32.mrf.mxu0
        %v978 = vadd.f32 0.0, %v977
        %v979 = vpop.f32.mrf.mxu0
        %980 = vdwg.mxu0
        %v982 = vsel %vm832, %v958, 0
        %v985 = vsel %vm964, %v827, 0
        %987 = vmatpush.bf16.msra.mxu0 0
        %988 = vmatpush.bf16.msra.mxu0 0
        %989 = vmatpush.bf16.msra.mxu0 0
        %990 = vmatpush.bf16.msra.mxu0 0
        %991 = vmatpush.bf16.msra.mxu0 0
        %992 = vmatpush.bf16.msra.mxu0 0
        %993 = vmatpush.bf16.msra.mxu0 0
        %994 = vmatpush.bf16.msra.mxu0 %v985
        %995 = vmatmul.bf16.gmra.mxu0 %v982
        %v996 = vpop.f32.mrf.mxu0
        %v997 = vadd.f32 0.0, %v996
        %v998 = vpop.f32.mrf.mxu0
        %999 = vdwg.mxu0
        %v1001 = vsel %vm832, %v959, 0
        %v1004 = vsel %vm964, %v829, 0
        %1006 = vmatpush.bf16.msra.mxu0 0
        %1007 = vmatpush.bf16.msra.mxu0 0
        %1008 = vmatpush.bf16.msra.mxu0 0
        %1009 = vmatpush.bf16.msra.mxu0 0
        %1010 = vmatpush.bf16.msra.mxu0 0
        %1011 = vmatpush.bf16.msra.mxu0 0
        %1012 = vmatpush.bf16.msra.mxu0 0
        %1013 = vmatpush.bf16.msra.mxu0 %v1004
        %1014 = vmatmul.bf16.gmra.mxu0 %v1001
        %v1015 = vpop.f32.mrf.mxu0
        %v1016 = vadd.f32 0.0, %v1015
        %v1017 = vpop.f32.mrf.mxu0
        %1018 = vdwg.mxu0
        %v1020 = vsel %vm832, %v960, 0
        %v1023 = vsel %vm964, %v831, 0
        %1025 = vmatpush.bf16.msra.mxu0 0
        %1026 = vmatpush.bf16.msra.mxu0 0
        %1027 = vmatpush.bf16.msra.mxu0 0
        %1028 = vmatpush.bf16.msra.mxu0 0
        %1029 = vmatpush.bf16.msra.mxu0 0
        %1030 = vmatpush.bf16.msra.mxu0 0
        %1031 = vmatpush.bf16.msra.mxu0 0
        %1032 = vmatpush.bf16.msra.mxu0 %v1023
        %1033 = vmatmul.bf16.gmra.mxu0 %v1020
        %v1034 = vpop.f32.mrf.mxu0
        %v1035 = vadd.f32 0.0, %v1034
        %v1036 = vpop.f32.mrf.mxu0
        %1037 = vdwg.mxu0
        %1039 = vrot.lane.b32.xlu0 %v997, 8
        %v1040 = vpop.permute.xlu0 %1039
        %1043 = vrot.lane.b32.xlu0 %v1016, 16
        %v1044 = vpop.permute.xlu0 %1043
        %1047 = vrot.lane.b32.xlu0 %v1035, 24
        %v1048 = vpop.permute.xlu0 %1047
        %v1050 = vsel %vm832, %v978, %v1040
        %vm1051 = vcmask 130048
        %v1052 = vsel %vm1051, %v1050, %v1044
        %vm1053 = vcmask 195584
        %v1054 = vsel %vm1053, %v1052, %v1048
        %v1055 = vpack.c.bf16 %v1054, %v1054
        %v1056 = vld [vmem:[#allocation7] sm:$0xf]
        %v1057 = vld [vmem:[#allocation7 + $0x4] sm:$0xf]
        %v1058 = vld [vmem:[#allocation7 + $0x8] sm:$0xf]
        %v1059 = vld [vmem:[#allocation7 + $0xc] sm:$0xf]
        %v1060 = vld [vmem:[%s10] sm:$0x1]
        %v1062 = vperm.slane %v1060, 0
        %v1068 = vunpack.c.l.b16 %v1056
        %v1069 = vunpack.c.l.b16 %v1057
        %v1070 = vunpack.c.l.b16 %v1058
        %v1071 = vunpack.c.l.b16 %v1059
        %v1072 = vpack.c.b16 %v1069, %v1068
        %v1073 = vpack.c.b16 %v1071, %v1070
        %v1077 = vsel %vm667, %v1055, 0
        %1079 = vmatpush.bf16.msra.mxu0 0
        %1080 = vmatpush.bf16.msra.mxu0 0
        %1081 = vmatpush.bf16.msra.mxu0 0
        %1082 = vmatpush.bf16.msra.mxu0 0
        %1083 = vmatpush.bf16.msra.mxu0 0
        %1084 = vmatpush.bf16.msra.mxu0 0
        %1085 = vmatpush.bf16.msra.mxu0 %v1073
        %1086 = vmatpush.bf16.msra.mxu0 %v1072
        %1087 = vmatmul.bf16.gmra.mxu0 %v1077
        %v1088 = vpop.f32.mrf.mxu0
        %v1089 = vadd.f32 %v1062, %v1088
        %v1090 = vpop.f32.mrf.mxu0
        %1091 = vdwg.mxu0
        %v1092 = vadd.f32 %v664, %v1089
        %v1093 = vld [vmem:[%s11] sm:$0x1]
        %v1094 = vld [vmem:[%s12] sm:$0x1]
        %v1095 = vsel %vm667, %v1092, 0.0
        %1096 = vadd.xlane.f32.xlu0 %v1095
        %v1097 = vpop.xlane.xlu0 %1096
        %v1098 = vmul.f32 %v1097, %v677
        %v1099 = vsub.f32 %v1092, %v1098
        %v1100 = vmul.f32 %v1099, %v1099
        %v1101 = vsel %vm667, %v1100, 0.0
        %1102 = vadd.xlane.f32.xlu0 %v1101
        %v1103 = vpop.xlane.xlu0 %1102
        %v1104 = vmul.f32 %v1103, %v677
        %v1105 = vadd.f32 %v1104, 1e-06
        %v1106 = vrsqrt.pop %v1105
        %v1107 = vmul.f32 %v1106, %v1105
        %v1108 = vmul.f32 %v1107, %v1106
        %v1109 = vmul.f32 0.5, %v1108
        %v1110 = vsub.f32 1.5, %v1109
        %v1111 = vmul.f32 %v1106, %v1110
        %vm1112 = vweird.f32 %v1105
        %vm1113 = vweird.f32 %v1106
        %vm1114 = vmor %vm1112, %vm1113
        %v1115 = vsel %vm1114, %v1106, %v1111
        %v1116 = vmul.f32 %v1099, %v1115
        %v1118 = vperm.slane %v1093, 0
        %v1120 = vmul.f32 %v1116, %v1118
        %v1122 = vperm.slane %v1094, 0
        %v1124 = vadd.f32 %v1120, %v1122
        %v1125 = vpack.c.bf16 %v1124, %v1124
        %v1126 = vld [vmem:[#allocation8] sm:$0xf]
        %v1127 = vld [vmem:[#allocation8 + $0x4] sm:$0xf]
        %v1128 = vld [vmem:[#allocation8 + $0x8] sm:$0xf]
        %v1129 = vld [vmem:[#allocation8 + $0xc] sm:$0xf]
        %v1130 = vld [vmem:[%s14] sm:$0x1]
        %v1132 = vperm.slane %v1130, 0
        %v1138 = vunpack.c.l.b16 %v1126
        %v1139 = vunpack.c.l.b16 %v1127
        %v1140 = vunpack.c.l.b16 %v1128
        %v1141 = vunpack.c.l.b16 %v1129
        %v1142 = vpack.c.b16 %v1139, %v1138
        %v1143 = vpack.c.b16 %v1141, %v1140
        %v1147 = vsel %vm667, %v1125, 0
        %1149 = vmatpush.bf16.msra.mxu0 0
        %1150 = vmatpush.bf16.msra.mxu0 0
        %1151 = vmatpush.bf16.msra.mxu0 0
        %1152 = vmatpush.bf16.msra.mxu0 0
        %1153 = vmatpush.bf16.msra.mxu0 0
        %1154 = vmatpush.bf16.msra.mxu0 0
        %1155 = vmatpush.bf16.msra.mxu0 %v1143
        %1156 = vmatpush.bf16.msra.mxu0 %v1142
        %1157 = vmatmul.bf16.gmra.mxu0 %v1147
        %v1158 = vpop.f32.mrf.mxu0
        %v1159 = vadd.f32 %v1132, %v1158
        %v1160 = vpop.f32.mrf.mxu0
        %1161 = vdwg.mxu0
        %v1162 = vmul.f32 %v1159, 0.5
        %v1163 = vmul.f32 %v1159, 0.70710677
        %v1164 = vmul.f32 %v1163, %v1163
        %v1165 = vmin.f32 16.0, %v1164
        %v1166 = vmul.f32 %v1165, 2.1237322e-06
        %v1167 = vadd.f32 %v1166, 0.00028619796
        %v1168 = vmul.f32 %v1165, %v1167
        %v1169 = vadd.f32 %v1168, 0.0036580483
        %v1170 = vmul.f32 %v1165, %v1169
        %v1171 = vadd.f32 %v1170, 0.05243302
        %v1172 = vmul.f32 %v1165, %v1171
        %v1173 = vadd.f32 %v1172, 0.18741608
        %v1174 = vmul.f32 %v1165, %v1173
        %v1175 = vadd.f32 %v1174, 1.1283791
        %v1176 = vmul.f32 %v1163, %v1175
        %v1177 = vmul.f32 %v1165, 3.8918573e-05
        %v1178 = vadd.f32 %v1177, 0.001143296
        %v1179 = vmul.f32 %v1165, %v1178
        %v1180 = vadd.f32 %v1179, 0.014752088
        %v1181 = vmul.f32 %v1165, %v1180
        %v1182 = vadd.f32 %v1181, 0.112945676
        %v1183 = vmul.f32 %v1165, %v1182
        %v1184 = vadd.f32 %v1183, 0.4994258
        %v1185 = vmul.f32 %v1165, %v1184
        %v1186 = vadd.f32 %v1185, 1.0
        %v1187 = vrcp.pop %v1186
        %v1188 = vmul.f32 %v1186, %v1187
        %v1189 = vsub.f32 1.0, %v1188
        %v1190 = vmul.f32 %v1187, %v1189
        %v1191 = vadd.f32 %v1187, %v1190
        %vm1192 = vweird.f32 %v1186
        %vm1193 = vweird.f32 %v1187
        %vm1194 = vmor %vm1192, %vm1193
        %v1195 = vsel %vm1194, %v1187, %v1191
        %v1196 = vand.u32 2147483647, %v1186
        %vm1197 = vcmp.eq.f32.partialorder %v1196, 8.507059e+37
        %v1198 = vand.u32 %v1186, 2147483648
        %v1199 = vor.u32 1.1754944e-38, %v1198
        %v1200 = vsel %vm1197, %v1199, %v1195
        %v1201 = vmul.f32 %v1176, %v1200
        %v1202 = vmin.f32 %v1201, 1.0
        %v1203 = vmax.f32 %v1202, -1.0
        %v1204 = vadd.f32 %v1203, 1.0
        %v1205 = vmul.f32 %v1162, %v1204
        %v1206 = vpack.c.bf16 %v1205, %v1205
        %v1207 = vld [vmem:[%s15] sm:$0xf]
        %v1208 = vld [vmem:[%s15 + $0x4] sm:$0xf]
        %v1209 = vld [vmem:[%s15 + $0x8] sm:$0xf]
        %v1210 = vld [vmem:[%s15 + $0xc] sm:$0xf]
        %v1211 = vld [vmem:[%s15 + $0x10] sm:$0xf]
        %v1212 = vld [vmem:[%s15 + $0x14] sm:$0xf]
        %v1213 = vld [vmem:[%s15 + $0x18] sm:$0xf]
        %v1214 = vld [vmem:[%s15 + $0x1c] sm:$0xf]
        %v1215 = vld [vmem:[%s16] sm:$0x1]
        %v1217 = vperm.slane %v1215, 0
        %v1227 = vunpack.c.l.b16 %v1207
        %v1228 = vunpack.c.l.b16 %v1208
        %v1229 = vunpack.c.l.b16 %v1209
        %v1230 = vunpack.c.l.b16 %v1210
        %v1231 = vunpack.c.l.b16 %v1211
        %v1232 = vunpack.c.l.b16 %v1212
        %v1233 = vunpack.c.l.b16 %v1213
        %v1234 = vunpack.c.l.b16 %v1214
        %v1235 = vpack.c.b16 %v1228, %v1227
        %v1236 = vpack.c.b16 %v1230, %v1229
        %v1237 = vpack.c.b16 %v1232, %v1231
        %v1238 = vpack.c.b16 %v1234, %v1233
        %vm1243 = vcmask 523264
        %v1245 = vsel %vm1243, %v1206, 0
        %1247 = vmatpush.bf16.msra.mxu0 0
        %1248 = vmatpush.bf16.msra.mxu0 0
        %1249 = vmatpush.bf16.msra.mxu0 0
        %1250 = vmatpush.bf16.msra.mxu0 0
        %1251 = vmatpush.bf16.msra.mxu0 %v1238
        %1252 = vmatpush.bf16.msra.mxu0 %v1237
        %1253 = vmatpush.bf16.msra.mxu0 %v1236
        %1254 = vmatpush.bf16.msra.mxu0 %v1235
        %1255 = vmatmul.bf16.gmra.mxu0 %v1245
        %v1256 = vpop.f32.mrf.mxu0
        %v1257 = vadd.f32 %v1217, %v1256
        %v1258 = vpop.f32.mrf.mxu0
        %1259 = vdwg.mxu0
        %v1260 = vadd.f32 %v1092, %v1257
        %1261 = vst.msk [vmem:[%s658] sm:$0xff] %vm667, %v1260
        %s1262 = sand.u32 %s448, 1
        %s1263 = scalar_lea.sflag [#allocation4], %s1262
        %s1264 = sand.u32 %s448, 1
        %s1265 = smul.addr %s1264, 8
        %s1266 = scalar_lea.vmem [#allocation10], %s1265
        // Predicated region
        $region113: #{tpu_custom_call.1} parent=95 // pred_check
          %p1267 = pneg %p458
        $region114: #{tpu_custom_call.1} parent=95 // pred_check_branch
          %1269 = sbr.rel (%p1267) target = $region116
        $region115: #{tpu_custom_call.1} parent=95 // pred_region
          %1271 = vsyncadd %s1263, 0
          %s1272 = smul.addr %s36, 8
          %s1273 = scalar_lea.hbm %s19, %s1272
          %s1275 = sshll.u32 %s1266, 4
          %s1276 = int_to_ptr.vmem [resolvable:$true] %s1275
          %s1277 = sshll.u32 %s1273, 4
          %s1278 = int_to_ptr.hbm [resolvable:$true] %s1277
          %1280 = dma.vmem_to_hbm [thread:$0]  %s1276, 128, %s1278, %s1263
        $region116: #{tpu_custom_call.1} parent=95 // pred_fallthru
          _
      $region96: #{tpu_custom_call.1} parent=5 // pred_fallthru
        _
      %p1281 = scmp.le.s32.totalorder 2, %s31
      // Predicated region
      $region117: #{tpu_custom_call.1} parent=5 // pred_check
        %p1282 = pneg %p1281
      $region118: #{tpu_custom_call.1} parent=5 // pred_check_branch
        %1284 = sbr.rel (%p1282) target = $region120
      $region119: #{tpu_custom_call.1} parent=5 // pred_region
        %s1285 = ssub.s32 %s31, 2
        // Predicated region
        $region121: #{tpu_custom_call.1} parent=119 // pred_check
          %p1286 = pneg %p464
        $region122: #{tpu_custom_call.1} parent=119 // pred_check_branch
          %1288 = sbr.rel (%p1286) target = $region124
        $region123: #{tpu_custom_call.1} parent=119 // pred_region
          %s1289 = sand.u32 %s449, 1
          %s1290 = scalar_lea.sflag [#allocation4], %s1289
          %s1291 = sand.u32 %s449, 1
          %s1292 = smul.addr %s1291, 8
          %s1293 = scalar_lea.vmem [#allocation10], %s1292
          %1295 = dma.done %s1290, 128
        $region124: #{tpu_custom_call.1} parent=119 // pred_fallthru
          _
      $region120: #{tpu_custom_call.1} parent=5 // pred_fallthru
        _
    $region6: #{tpu_custom_call.1} parent=1 // loop_footer
      %s35 = sadd.s32 1, %s31
    $region7: #{tpu_custom_call.1} parent=1 // loop_footer_branch
      %30 = sbr.rel target = $region3
    $region8: #{tpu_custom_call.1} parent=1 // loop_exit
      _
    %1296 = vsyncpa [#allocation3], 1
    %s1297 = scalar_lea.sflag [#allocation3], 1
    %1298 = vsyncpa %s1297, 1
    %1299 = vsyncpa [#allocation6], 1
    %1300 = vsyncpa [#allocation9], 1
    %1301 = vsyncpa [#allocation4], 1
    %s1302 = scalar_lea.sflag [#allocation4], 1
    %1303 = vsyncpa %s1302, 1

</llo_original>
